<compile_context>
chip_gen: v7x
topology: tpu7x:2x2x1
jax: 0.10.0
libtpu: 0.0.40
codegen_flags: <defaults>
</compile_context>

<pallas_src>
import functools
import math

import jax
import jax.numpy as jnp
from jax import lax
from jax.experimental import pallas as pl
from jax.experimental.pallas import tpu as pltpu


# ---------------------------------------------------------------------------
# Kernel
# ---------------------------------------------------------------------------
def _cross_fusion_kernel(q_ref, kv_ref,
                         wq_ref, wk_ref, wv_ref, wo_ref,
                         bq_ref, bk_ref, bv_ref,
                         bo_ref, gamma_ref, beta_ref,
                         o_ref, acc_ref,
                         *, group_size, head_dim):
    eps = 1e-5
    g = pl.program_id(2)                     # head-group index (inner, "arbitrary")
    G, hd = group_size, head_dim
    Gh = G * hd

    @pl.when(g == 0)
    def _init():
        acc_ref[...] = jnp.zeros_like(acc_ref)

    q = q_ref[...]                           # (tile_lq, D), input dtype
    kv = kv_ref[...]                         # (Lkv, D)
    cdt = q.dtype
    tile_lq = q.shape[0]
    lkv = kv.shape[0]

    # Resident group-major weights; cheap leading-axis dynamic select (no lane slicing).
    wq_g = wq_ref[g]                         # (D, Gh)  (softmax scale pre-folded)
    wk_g = wk_ref[g]                         # (D, Gh)
    wv_g = wv_ref[g]                         # (D, Gh)
    wo_g = wo_ref[g]                         # (Gh, D)
    bq_g = bq_ref[g]                         # (1, Gh)  (pre-scaled)
    bk_g = bk_ref[g]                         # (1, Gh)
    bv_g = bv_ref[g]                         # (1, Gh)

    # Wide, lane-dense projections (K = D, N = G*hd); outputs stay in input dtype.
    qh = jnp.dot(q, wq_g, preferred_element_type=cdt) + bq_g     # (tile_lq, Gh)
    kh = jnp.dot(kv, wk_g, preferred_element_type=cdt) + bk_g    # (Lkv, Gh)
    vh = jnp.dot(kv, wv_g, preferred_element_type=cdt) + bv_g    # (Lkv, Gh)

    # Head-major views for the batched (over the G heads) attention matmuls.
    qh = qh.reshape(tile_lq, G, hd).transpose(1, 0, 2)           # (G, tile_lq, hd)
    kh = kh.reshape(lkv, G, hd).transpose(1, 0, 2)               # (G, Lkv, hd)
    vh = vh.reshape(lkv, G, hd).transpose(1, 0, 2)               # (G, Lkv, hd)

    # scores = q @ k^T per head, f32 accumulation.
    scores = jnp.einsum("gqd,gkd->gqk", qh, kh,
                        preferred_element_type=jnp.float32)      # (G, tile_lq, Lkv)

    # Numerically stable softmax in f32; divide via EUP approximate reciprocal.
    m = jnp.max(scores, axis=-1, keepdims=True)
    p = jnp.exp(scores - m)
    denom = jnp.sum(p, axis=-1, keepdims=True)
    p = p * pl.reciprocal(denom, approx=True)

    ctx = jnp.einsum("gqk,gkd->gqd", p.astype(cdt), vh,
                     preferred_element_type=cdt)                 # (G, tile_lq, hd)

    # Back to lane-dense (tile_lq, G*hd) for a single wide output-projection matmul.
    ctx = ctx.transpose(1, 0, 2).reshape(tile_lq, Gh)

    acc_ref[...] += jnp.dot(ctx, wo_g, preferred_element_type=jnp.float32)

    @pl.when(g == pl.num_programs(2) - 1)
    def _finalize():
        attn = acc_ref[...] + bo_ref[...]                        # (tile_lq, D), f32
        y = q.astype(jnp.float32) + attn                         # residual
        mean = jnp.mean(y, axis=-1, keepdims=True)
        centered = y - mean
        var = jnp.mean(centered * centered, axis=-1, keepdims=True)
        normed = centered * lax.rsqrt(var + eps)
        o_ref[...] = (normed * gamma_ref[...] + beta_ref[...]).astype(o_ref.dtype)


# ---------------------------------------------------------------------------
# Host-side helpers
# ---------------------------------------------------------------------------
def _pick_group_size(num_heads, head_dim, lane_target=256):
    """Largest divisor of num_heads with group_size*head_dim <= lane_target."""
    cap = max(1, lane_target // max(head_dim, 1))
    best = 1
    for cand in range(1, num_heads + 1):
        if num_heads % cand == 0 and cand <= cap:
            best = cand
    return best


def _pick_lq_tile(lq, cap=512):
    """Largest multiple-of-8 divisor of Lq that is <= cap (or full Lq)."""
    if lq <= cap:
        return lq
    start = (min(cap, lq) // 8) * 8
    for t in range(start, 0, -8):
        if lq % t == 0:
            return t
    return lq


def _vmem_limit_bytes():
    """Generation-aware scoped-VMEM limit: ~75% of physical per-core VMEM
    (~48 MiB on v7x, ~96 MiB on v5e/v6e), leaving headroom for compiler scratch."""
    try:
        return (int(pltpu.get_tpu_info().vmem_capacity_bytes) * 3) // 4
    except Exception:  # pragma: no cover - fall back to compiler default
        return None


def prepare_params(params, num_heads, *, dtype=None, group_size=None, lane_target=256):
    """One-time host-side regrouping of the weights (do NOT call per forward).

    params: 'wq','wk','wv','wo' as (D_in, D_out) (i.e. torch W.T), 'bq','bk','bv',
    'bo','gamma','beta' as (1, D).
    Returns a dict of kernel-ready, group-major tensors + static metadata.
    """
    wq, wk, wv, wo = params["wq"], params["wk"], params["wv"], params["wo"]
    D = wq.shape[0]
    assert D % num_heads == 0, "dim must be divisible by num_heads"
    hd = D // num_heads
    if group_size is None:
        group_size = _pick_group_size(num_heads, hd, lane_target)
    assert num_heads % group_size == 0
    G = group_size
    ng = num_heads // G
    Gh = G * hd
    cdt = jnp.dtype(dtype) if dtype is not None else wq.dtype

    scale = 1.0 / math.sqrt(hd)
    wq_s = wq * scale                       # fold 1/sqrt(head_dim) into Q projection
    bq_s = params["bq"] * scale

    def group_in(w):                        # (D, D) -> (ng, D, Gh), head-major cols
        return w.reshape(D, ng, Gh).transpose(1, 0, 2)

    def group_b(b):                         # (1, D) -> (ng, 1, Gh)
        return b.reshape(ng, 1, Gh)

    return {
        "wq": group_in(wq_s).astype(cdt),
        "wk": group_in(wk).astype(cdt),
        "wv": group_in(wv).astype(cdt),
        "wo": wo.reshape(ng, Gh, D).astype(cdt),
        "bq": group_b(bq_s).astype(cdt),
        "bk": group_b(params["bk"]).astype(cdt),
        "bv": group_b(params["bv"]).astype(cdt),
        "bo": params["bo"].reshape(1, D).astype(jnp.float32),
        "gamma": params["gamma"].reshape(1, D).astype(jnp.float32),
        "beta": params["beta"].reshape(1, D).astype(jnp.float32),
        "num_heads": num_heads,
        "group_size": G,
        "num_groups": ng,
        "head_dim": hd,
        "dim": D,
    }


def cross_fusion(query, key_value, prepared, *, lq_tile=None):
    """Fused MultiheadAttention(query, kv, kv) + residual + LayerNorm."""
    B, Lq, D = query.shape
    _, Lkv, _ = key_value.shape
    assert D == prepared["dim"]

    G = prepared["group_size"]
    hd = prepared["head_dim"]
    ng = prepared["num_groups"]
    Gh = G * hd

    tile_lq = lq_tile if lq_tile is not None else _pick_lq_tile(Lq)
    assert Lq % tile_lq == 0
    n_lq = Lq // tile_lq

    q_map = lambda b, i, g: (b, i, 0)
    kv_map = lambda b, i, g: (b, 0, 0)
    w_map = lambda b, i, g: (0, 0, 0)       # constant -> fetched once, VMEM-resident
    vec_map = lambda b, i, g: (0, 0)

    kernel = functools.partial(_cross_fusion_kernel, group_size=G, head_dim=hd)

    return pl.pallas_call(
        kernel,
        out_shape=jax.ShapeDtypeStruct((B, Lq, D), query.dtype),
        grid_spec=pltpu.PrefetchScalarGridSpec(
            num_scalar_prefetch=0,
            grid=(B, n_lq, ng),
            in_specs=[
                pl.BlockSpec((None, tile_lq, D), q_map),      # query tile
                pl.BlockSpec((None, Lkv, D), kv_map),         # key/value (full Lkv)
                pl.BlockSpec((ng, D, Gh), w_map),             # wq (group-major, resident)
                pl.BlockSpec((ng, D, Gh), w_map),             # wk
                pl.BlockSpec((ng, D, Gh), w_map),             # wv
                pl.BlockSpec((ng, Gh, D), w_map),             # wo
                pl.BlockSpec((ng, 1, Gh), w_map),             # bq
                pl.BlockSpec((ng, 1, Gh), w_map),             # bk
                pl.BlockSpec((ng, 1, Gh), w_map),             # bv
                pl.BlockSpec((1, D), vec_map),                # bo
                pl.BlockSpec((1, D), vec_map),                # gamma
                pl.BlockSpec((1, D), vec_map),                # beta
            ],
            out_specs=pl.BlockSpec((None, tile_lq, D), q_map),
            scratch_shapes=[pltpu.VMEM((tile_lq, D), jnp.float32)],  # out-proj acc
        ),
        compiler_params=pltpu.CompilerParams(
            dimension_semantics=("parallel", "parallel", "arbitrary"),
            vmem_limit_bytes=_vmem_limit_bytes(),
        ),
    )(query, key_value,
      prepared["wq"], prepared["wk"], prepared["wv"], prepared["wo"],
      prepared["bq"], prepared["bk"], prepared["bv"],
      prepared["bo"], prepared["gamma"], prepared["beta"])


# ---------------------------------------------------------------------------
# Synthetic parameters + pure-JAX reference
# ---------------------------------------------------------------------------
def init_params(key, dim):
    """Synthetic init matching nn.MultiheadAttention + LayerNorm shapes
    (weights stored already transposed to (D_in, D_out))."""
    ks = jax.random.split(key, 4)
    scale = 1.0 / (dim ** 0.5)
    zeros = jnp.zeros((1, dim), jnp.float32)
    return {
        "wq": jax.random.normal(ks[0], (dim, dim), jnp.float32) * scale,
        "wk": jax.random.normal(ks[1], (dim, dim), jnp.float32) * scale,
        "wv": jax.random.normal(ks[2], (dim, dim), jnp.float32) * scale,
        "wo": jax.random.normal(ks[3], (dim, dim), jnp.float32) * scale,
        "bq": zeros, "bk": zeros, "bv": zeros, "bo": zeros,
        "gamma": jnp.ones((1, dim), jnp.float32),
        "beta": jnp.zeros((1, dim), jnp.float32),
    }


def _reference(query, key_value, params, num_heads):
    """Pure-JAX reference of the PyTorch CrossFusion forward."""
    B, Lq, D = query.shape
    Lkv = key_value.shape[1]
    hd = D // num_heads
    scale = 1.0 / (hd ** 0.5)
    qp = query @ params["wq"] + params["bq"]
    kp = key_value @ params["wk"] + params["bk"]
    vp = key_value @ params["wv"] + params["bv"]
    qh = qp.reshape(B, Lq, num_heads, hd).transpose(0, 2, 1, 3)
    kh = kp.reshape(B, Lkv, num_heads, hd).transpose(0, 2, 1, 3)
    vh = vp.reshape(B, Lkv, num_heads, hd).transpose(0, 2, 1, 3)
    s = jnp.einsum("bhqd,bhkd->bhqk", qh, kh) * scale
    p = jax.nn.softmax(s, axis=-1)
    ctx = jnp.einsum("bhqk,bhkd->bhqd", p, vh)
    ctx = ctx.transpose(0, 2, 1, 3).reshape(B, Lq, D)
    attn = ctx @ params["wo"] + params["bo"]
    y = query + attn
    mean = y.mean(-1, keepdims=True)
    var = ((y - mean) ** 2).mean(-1, keepdims=True)
    return (y - mean) / jnp.sqrt(var + 1e-5) * params["gamma"] + params["beta"]


if __name__ == "__main__":
    B, Lq, Lkv, D, H = 2, 8, 8, 32, 4

    key = jax.random.PRNGKey(0)
    k_q, k_kv, k_p = jax.random.split(key, 3)
    query = jax.random.normal(k_q, (B, Lq, D), jnp.float32)
    key_value = jax.random.normal(k_kv, (B, Lkv, D), jnp.float32)
    params = init_params(k_p, D)

    # One-time host-side weight regrouping (auto group: all 4 heads in one group).
    prepared = prepare_params(params, num_heads=H)
    out = cross_fusion(query, key_value, prepared)
    jax.block_until_ready(out)
    assert out.shape == (B, Lq, D)
    ref = _reference(query, key_value, params, H)
    assert bool(jnp.allclose(out, ref, atol=2e-2, rtol=2e-2)), "mismatch (test 1)"

    # Second config: Lq != Lkv, forced Lq tiling (2 tiles of 8) and 2 head groups,
    # exercising the multi-tile and multi-group accumulation paths.
    B2, Lq2, Lkv2 = 2, 16, 8
    q2 = jax.random.normal(jax.random.PRNGKey(1), (B2, Lq2, D), jnp.float32)
    kv2 = jax.random.normal(jax.random.PRNGKey(2), (B2, Lkv2, D), jnp.float32)
    prepared2 = prepare_params(params, num_heads=H, group_size=2)
    out2 = cross_fusion(q2, kv2, prepared2, lq_tile=8)
    jax.block_until_ready(out2)
    ref2 = _reference(q2, kv2, params, H)
    assert bool(jnp.allclose(out2, ref2, atol=2e-2, rtol=2e-2)), "mismatch (test 2)"

    print("KERNEL_OK")
</pallas_src>

<mosaic_0001>
module attributes {stable_mosaic.version = 11 : i64} {
  func.func @_cross_fusion_kernel(%arg0: i32, %arg1: i32, %arg2: i32, %arg3: memref<1x8x32xf32, #tpu.memory_space<vmem>>, %arg4: memref<1x8x32xf32, #tpu.memory_space<vmem>>, %arg5: memref<1x32x32xf32, #tpu.memory_space<vmem>>, %arg6: memref<1x32x32xf32, #tpu.memory_space<vmem>>, %arg7: memref<1x32x32xf32, #tpu.memory_space<vmem>>, %arg8: memref<1x32x32xf32, #tpu.memory_space<vmem>>, %arg9: memref<1x1x32xf32, #tpu.memory_space<vmem>>, %arg10: memref<1x1x32xf32, #tpu.memory_space<vmem>>, %arg11: memref<1x1x32xf32, #tpu.memory_space<vmem>>, %arg12: memref<1x32xf32, #tpu.memory_space<vmem>>, %arg13: memref<1x32xf32, #tpu.memory_space<vmem>>, %arg14: memref<1x32xf32, #tpu.memory_space<vmem>>, %arg15: memref<1x8x32xf32, #tpu.memory_space<vmem>>, %arg16: memref<8x32xf32, #tpu.memory_space<vmem>>) attributes {dimension_semantics = [#tpu.dimension_semantics<parallel>, #tpu.dimension_semantics<parallel>, #tpu.dimension_semantics<arbitrary>], iteration_bounds = array<i64: 2, 1, 1>, scalar_prefetch = 0 : i64, scratch_operands = 1 : i64, tpu.core_type = #tpu.core_type<tc>, window_params = [{transform_indices = @transform_0, window_bounds = array<i64: 1, 8, 32>}, {transform_indices = @transform_1, window_bounds = array<i64: 1, 8, 32>}, {pipeline_mode = #tpu.pipeline_mode<synchronous>, transform_indices = @transform_2, window_bounds = array<i64: 1, 32, 32>}, {pipeline_mode = #tpu.pipeline_mode<synchronous>, transform_indices = @transform_3, window_bounds = array<i64: 1, 32, 32>}, {pipeline_mode = #tpu.pipeline_mode<synchronous>, transform_indices = @transform_4, window_bounds = array<i64: 1, 32, 32>}, {pipeline_mode = #tpu.pipeline_mode<synchronous>, transform_indices = @transform_5, window_bounds = array<i64: 1, 32, 32>}, {pipeline_mode = #tpu.pipeline_mode<synchronous>, transform_indices = @transform_6, window_bounds = array<i64: 1, 1, 32>}, {pipeline_mode = #tpu.pipeline_mode<synchronous>, transform_indices = @transform_7, window_bounds = array<i64: 1, 1, 32>}, {pipeline_mode = #tpu.pipeline_mode<synchronous>, transform_indices = @transform_8, window_bounds = array<i64: 1, 1, 32>}, {pipeline_mode = #tpu.pipeline_mode<synchronous>, transform_indices = @transform_9, window_bounds = array<i64: 1, 32>}, {pipeline_mode = #tpu.pipeline_mode<synchronous>, transform_indices = @transform_10, window_bounds = array<i64: 1, 32>}, {pipeline_mode = #tpu.pipeline_mode<synchronous>, transform_indices = @transform_11, window_bounds = array<i64: 1, 32>}, {transform_indices = @transform_12, window_bounds = array<i64: 1, 8, 32>}]} {
    %c0_i32 = arith.constant 0 : i32
    %0 = arith.cmpi eq, %arg2, %c0_i32 : i32
    %1 = arith.extui %0 : i1 to i32
    %c0_i32_0 = arith.constant 0 : i32
    %2 = arith.cmpi ne, %1, %c0_i32_0 : i32
    scf.if %2 {
      %cst_33 = arith.constant 0.000000e+00 : f32
      %64 = vector.broadcast %cst_33 : f32 to vector<8x32xf32>
      %c0_34 = arith.constant 0 : index
      %c0_35 = arith.constant 0 : index
      %65 = vector.load %arg16[%c0_34, %c0_35] : memref<8x32xf32, #tpu.memory_space<vmem>>, vector<8x32xf32>
      tpu.vector_store %arg16[%c0_34, %c0_35], %64 {strides = array<i32>} : memref<8x32xf32, #tpu.memory_space<vmem>>, vector<8x32xf32>,
    } else {
    }
    %c0 = arith.constant 0 : index
    %c0_1 = arith.constant 0 : index
    %c0_2 = arith.constant 0 : index
    %3 = vector.load %arg3[%c0, %c0_1, %c0_2] : memref<1x8x32xf32, #tpu.memory_space<vmem>>, vector<1x8x32xf32>
    %4 = vector.shape_cast %3 : vector<1x8x32xf32> to vector<8x32xf32>
    %c0_3 = arith.constant 0 : index
    %c0_4 = arith.constant 0 : index
    %c0_5 = arith.constant 0 : index
    %5 = vector.load %arg4[%c0_3, %c0_4, %c0_5] : memref<1x8x32xf32, #tpu.memory_space<vmem>>, vector<1x8x32xf32>
    %6 = vector.shape_cast %5 : vector<1x8x32xf32> to vector<8x32xf32>
    %7 = arith.index_cast %arg2 : i32 to index
    %c0_6 = arith.constant 0 : index
    %c0_7 = arith.constant 0 : index
    %8 = vector.load %arg5[%7, %c0_6, %c0_7] : memref<1x32x32xf32, #tpu.memory_space<vmem>>, vector<1x32x32xf32>
    %9 = vector.shape_cast %8 : vector<1x32x32xf32> to vector<32x32xf32>
    %10 = arith.index_cast %arg2 : i32 to index
    %c0_8 = arith.constant 0 : index
    %c0_9 = arith.constant 0 : index
    %11 = vector.load %arg6[%10, %c0_8, %c0_9] : memref<1x32x32xf32, #tpu.memory_space<vmem>>, vector<1x32x32xf32>
    %12 = vector.shape_cast %11 : vector<1x32x32xf32> to vector<32x32xf32>
    %13 = arith.index_cast %arg2 : i32 to index
    %c0_10 = arith.constant 0 : index
    %c0_11 = arith.constant 0 : index
    %14 = vector.load %arg7[%13, %c0_10, %c0_11] : memref<1x32x32xf32, #tpu.memory_space<vmem>>, vector<1x32x32xf32>
    %15 = vector.shape_cast %14 : vector<1x32x32xf32> to vector<32x32xf32>
    %16 = arith.index_cast %arg2 : i32 to index
    %c0_12 = arith.constant 0 : index
    %c0_13 = arith.constant 0 : index
    %17 = vector.load %arg8[%16, %c0_12, %c0_13] : memref<1x32x32xf32, #tpu.memory_space<vmem>>, vector<1x32x32xf32>
    %18 = vector.shape_cast %17 : vector<1x32x32xf32> to vector<32x32xf32>
    %19 = arith.index_cast %arg2 : i32 to index
    %c0_14 = arith.constant 0 : index
    %c0_15 = arith.constant 0 : index
    %20 = vector.load %arg9[%19, %c0_14, %c0_15] : memref<1x1x32xf32, #tpu.memory_space<vmem>>, vector<1x1x32xf32>
    %21 = vector.shape_cast %20 : vector<1x1x32xf32> to vector<1x32xf32>
    %22 = arith.index_cast %arg2 : i32 to index
    %c0_16 = arith.constant 0 : index
    %c0_17 = arith.constant 0 : index
    %23 = vector.load %arg10[%22, %c0_16, %c0_17] : memref<1x1x32xf32, #tpu.memory_space<vmem>>, vector<1x1x32xf32>
    %24 = vector.shape_cast %23 : vector<1x1x32xf32> to vector<1x32xf32>
    %25 = arith.index_cast %arg2 : i32 to index
    %c0_18 = arith.constant 0 : index
    %c0_19 = arith.constant 0 : index
    %26 = vector.load %arg11[%25, %c0_18, %c0_19] : memref<1x1x32xf32, #tpu.memory_space<vmem>>, vector<1x1x32xf32>
    %27 = vector.shape_cast %26 : vector<1x1x32xf32> to vector<1x32xf32>
    %cst = arith.constant dense<0.000000e+00> : vector<8x32xf32>
    %28 = tpu.matmul %4, %9, %cst {dimension_numbers = #tpu.dot_dimension_numbers<[1], [0], [0], [1], [0, 0, 1, 1], [], []>} : vector<8x32xf32>, vector<32x32xf32>, vector<8x32xf32> -> vector<8x32xf32>
    %29 = vector.broadcast %21 : vector<1x32xf32> to vector<8x32xf32>
    %30 = arith.addf %28, %29 : vector<8x32xf32>
    %cst_20 = arith.constant dense<0.000000e+00> : vector<8x32xf32>
    %31 = tpu.matmul %6, %12, %cst_20 {dimension_numbers = #tpu.dot_dimension_numbers<[1], [0], [0], [1], [0, 0, 1, 1], [], []>} : vector<8x32xf32>, vector<32x32xf32>, vector<8x32xf32> -> vector<8x32xf32>
    %32 = vector.broadcast %24 : vector<1x32xf32> to vector<8x32xf32>
    %33 = arith.addf %31, %32 : vector<8x32xf32>
    %cst_21 = arith.constant dense<0.000000e+00> : vector<8x32xf32>
    %34 = tpu.matmul %6, %15, %cst_21 {dimension_numbers = #tpu.dot_dimension_numbers<[1], [0], [0], [1], [0, 0, 1, 1], [], []>} : vector<8x32xf32>, vector<32x32xf32>, vector<8x32xf32> -> vector<8x32xf32>
    %35 = vector.broadcast %27 : vector<1x32xf32> to vector<8x32xf32>
    %36 = arith.addf %34, %35 : vector<8x32xf32>
    %37 = vector.shape_cast %30 : vector<8x32xf32> to vector<8x4x8xf32>
    %38 = tpu.transpose %37, [1, 0, 2] : vector<8x4x8xf32> -> vector<4x8x8xf32>
    %39 = vector.shape_cast %33 : vector<8x32xf32> to vector<8x4x8xf32>
    %40 = tpu.transpose %39, [1, 0, 2] : vector<8x4x8xf32> -> vector<4x8x8xf32>
    %41 = vector.shape_cast %36 : vector<8x32xf32> to vector<8x4x8xf32>
    %42 = tpu.transpose %41, [1, 0, 2] : vector<8x4x8xf32> -> vector<4x8x8xf32>
    "tpu.trace_start"() <{level = 10 : i32, message = "gqd,gkd->gqk"}> : () -> ()
    %cst_22 = arith.constant dense<0.000000e+00> : vector<4x8x8xf32>
    %43 = tpu.matmul %38, %40, %cst_22 {dimension_numbers = #tpu.dot_dimension_numbers<[2], [2], [1], [1], [0, 0, 0, 1, 1, 1], [0], [0]>} : vector<4x8x8xf32>, vector<4x8x8xf32>, vector<4x8x8xf32> -> vector<4x8x8xf32>
    "tpu.trace_stop"() : () -> ()
    %cst_23 = arith.constant dense<0xFF800000> : vector<4x8xf32>
    %44 = vector.multi_reduction <maximumf>, %43, %cst_23 [2] : vector<4x8x8xf32> to vector<4x8xf32>
    %45 = vector.shape_cast %44 : vector<4x8xf32> to vector<4x8x1xf32>
    %46 = vector.broadcast %45 : vector<4x8x1xf32> to vector<4x8x8xf32>
    %47 = arith.subf %43, %46 : vector<4x8x8xf32>
    %48 = math.exp %47 : vector<4x8x8xf32>
    %cst_24 = arith.constant dense<0.000000e+00> : vector<4x8xf32>
    %49 = vector.multi_reduction <add>, %48, %cst_24 [2] : vector<4x8x8xf32> to vector<4x8xf32>
    %50 = vector.shape_cast %49 : vector<4x8xf32> to vector<4x8x1xf32>
    %51 = tpu.reciprocal %50 {approx = true} : vector<4x8x1xf32> -> vector<4x8x1xf32>
    %52 = vector.broadcast %51 : vector<4x8x1xf32> to vector<4x8x8xf32>
    %53 = arith.mulf %48, %52 : vector<4x8x8xf32>
    "tpu.trace_start"() <{level = 10 : i32, message = "gqk,gkd->gqd"}> : () -> ()
    %cst_25 = arith.constant dense<0.000000e+00> : vector<4x8x8xf32>
    %54 = tpu.matmul %53, %42, %cst_25 {dimension_numbers = #tpu.dot_dimension_numbers<[2], [1], [1], [2], [0, 0, 0, 1, 1, 2], [0], [0]>} : vector<4x8x8xf32>, vector<4x8x8xf32>, vector<4x8x8xf32> -> vector<4x8x8xf32>
    "tpu.trace_stop"() : () -> ()
    %55 = tpu.transpose %54, [1, 0, 2] : vector<4x8x8xf32> -> vector<8x4x8xf32>
    %56 = vector.shape_cast %55 : vector<8x4x8xf32> to vector<8x32xf32>
    %c0_26 = arith.constant 0 : index
    %c0_27 = arith.constant 0 : index
    %57 = vector.load %arg16[%c0_26, %c0_27] : memref<8x32xf32, #tpu.memory_space<vmem>>, vector<8x32xf32>
    %cst_28 = arith.constant dense<0.000000e+00> : vector<8x32xf32>
    %58 = tpu.matmul %56, %18, %cst_28 {dimension_numbers = #tpu.dot_dimension_numbers<[1], [0], [0], [1], [0, 0, 1, 1], [], []>} : vector<8x32xf32>, vector<32x32xf32>, vector<8x32xf32> -> vector<8x32xf32>
    %59 = arith.addf %57, %58 : vector<8x32xf32>
    %c0_29 = arith.constant 0 : index
    %c0_30 = arith.constant 0 : index
    %60 = vector.load %arg16[%c0_29, %c0_30] : memref<8x32xf32, #tpu.memory_space<vmem>>, vector<8x32xf32>
    tpu.vector_store %arg16[%c0_29, %c0_30], %59 {strides = array<i32>} : memref<8x32xf32, #tpu.memory_space<vmem>>, vector<8x32xf32>,
    %c0_i32_31 = arith.constant 0 : i32
    %61 = arith.cmpi eq, %arg2, %c0_i32_31 : i32
    %62 = arith.extui %61 : i1 to i32
    %c0_i32_32 = arith.constant 0 : i32
    %63 = arith.cmpi ne, %62, %c0_i32_32 : i32
    scf.if %63 {
      %c0_33 = arith.constant 0 : index
      %c0_34 = arith.constant 0 : index
      %64 = vector.load %arg16[%c0_33, %c0_34] : memref<8x32xf32, #tpu.memory_space<vmem>>, vector<8x32xf32>
      %c0_35 = arith.constant 0 : index
      %c0_36 = arith.constant 0 : index
      %65 = vector.load %arg12[%c0_35, %c0_36] : memref<1x32xf32, #tpu.memory_space<vmem>>, vector<1x32xf32>
      %66 = vector.broadcast %65 : vector<1x32xf32> to vector<8x32xf32>
      %67 = arith.addf %64, %66 : vector<8x32xf32>
      %68 = arith.addf %4, %67 : vector<8x32xf32>
      %cst_37 = arith.constant dense<0.000000e+00> : vector<8xf32>
      %69 = vector.multi_reduction <add>, %68, %cst_37 [1] : vector<8x32xf32> to vector<8xf32>
      %70 = vector.shape_cast %69 : vector<8xf32> to vector<8x1xf32>
      %cst_38 = arith.constant 3.200000e+01 : f32
      %71 = vector.broadcast %cst_38 : f32 to vector<8x1xf32>
      %72 = arith.divf %70, %71 : vector<8x1xf32>
      %73 = vector.broadcast %72 : vector<8x1xf32> to vector<8x32xf32>
      %74 = arith.subf %68, %73 : vector<8x32xf32>
      %75 = arith.mulf %74, %74 : vector<8x32xf32>
      %cst_39 = arith.constant dense<0.000000e+00> : vector<8xf32>
      %76 = vector.multi_reduction <add>, %75, %cst_39 [1] : vector<8x32xf32> to vector<8xf32>
      %77 = vector.shape_cast %76 : vector<8xf32> to vector<8x1xf32>
      %cst_40 = arith.constant 3.200000e+01 : f32
      %78 = vector.broadcast %cst_40 : f32 to vector<8x1xf32>
      %79 = arith.divf %77, %78 : vector<8x1xf32>
      %cst_41 = arith.constant 9.99999974E-6 : f32
      %80 = vector.broadcast %cst_41 : f32 to vector<8x1xf32>
      %81 = arith.addf %79, %80 : vector<8x1xf32>
      %82 = math.rsqrt %81 : vector<8x1xf32>
      %83 = vector.broadcast %82 : vector<8x1xf32> to vector<8x32xf32>
      %84 = arith.mulf %74, %83 : vector<8x32xf32>
      %c0_42 = arith.constant 0 : index
      %c0_43 = arith.constant 0 : index
      %85 = vector.load %arg13[%c0_42, %c0_43] : memref<1x32xf32, #tpu.memory_space<vmem>>, vector<1x32xf32>
      %86 = vector.broadcast %85 : vector<1x32xf32> to vector<8x32xf32>
      %87 = arith.mulf %84, %86 : vector<8x32xf32>
      %c0_44 = arith.constant 0 : index
      %c0_45 = arith.constant 0 : index
      %88 = vector.load %arg14[%c0_44, %c0_45] : memref<1x32xf32, #tpu.memory_space<vmem>>, vector<1x32xf32>
      %89 = vector.broadcast %88 : vector<1x32xf32> to vector<8x32xf32>
      %90 = arith.addf %87, %89 : vector<8x32xf32>
      %c0_46 = arith.constant 0 : index
      %c0_47 = arith.constant 0 : index
      %c0_48 = arith.constant 0 : index
      %91 = vector.load %arg15[%c0_46, %c0_47, %c0_48] : memref<1x8x32xf32, #tpu.memory_space<vmem>>, vector<1x8x32xf32>
      %92 = vector.shape_cast %91 : vector<1x8x32xf32> to vector<8x32xf32>
      %93 = vector.shape_cast %90 : vector<8x32xf32> to vector<1x8x32xf32>
      tpu.vector_store %arg15[%c0_46, %c0_47, %c0_48], %93 {strides = array<i32>} : memref<1x8x32xf32, #tpu.memory_space<vmem>>, vector<1x8x32xf32>,
    } else {
    }
    return
  }
  func.func @transform_0(%arg0: i32, %arg1: i32, %arg2: i32) -> (i32, i32, i32) {
    %c0_i32 = arith.constant 0 : i32
    %c0_i32_0 = arith.constant 0 : i32
    return %arg0, %arg1, %c0_i32 : i32, i32, i32
  }
  func.func @transform_1(%arg0: i32, %arg1: i32, %arg2: i32) -> (i32, i32, i32) {
    %c0_i32 = arith.constant 0 : i32
    %c0_i32_0 = arith.constant 0 : i32
    %c0_i32_1 = arith.constant 0 : i32
    return %arg0, %c0_i32, %c0_i32_0 : i32, i32, i32
  }
  func.func @transform_2(%arg0: i32, %arg1: i32, %arg2: i32) -> (i32, i32, i32) {
    %c0_i32 = arith.constant 0 : i32
    %c0_i32_0 = arith.constant 0 : i32
    %c0_i32_1 = arith.constant 0 : i32
    %c0_i32_2 = arith.constant 0 : i32
    return %c0_i32, %c0_i32_0, %c0_i32_1 : i32, i32, i32
  }
  func.func @transform_3(%arg0: i32, %arg1: i32, %arg2: i32) -> (i32, i32, i32) {
    %c0_i32 = arith.constant 0 : i32
    %c0_i32_0 = arith.constant 0 : i32
    %c0_i32_1 = arith.constant 0 : i32
    %c0_i32_2 = arith.constant 0 : i32
    return %c0_i32, %c0_i32_0, %c0_i32_1 : i32, i32, i32
  }
  func.func @transform_4(%arg0: i32, %arg1: i32, %arg2: i32) -> (i32, i32, i32) {
    %c0_i32 = arith.constant 0 : i32
    %c0_i32_0 = arith.constant 0 : i32
    %c0_i32_1 = arith.constant 0 : i32
    %c0_i32_2 = arith.constant 0 : i32
    return %c0_i32, %c0_i32_0, %c0_i32_1 : i32, i32, i32
  }
  func.func @transform_5(%arg0: i32, %arg1: i32, %arg2: i32) -> (i32, i32, i32) {
    %c0_i32 = arith.constant 0 : i32
    %c0_i32_0 = arith.constant 0 : i32
    %c0_i32_1 = arith.constant 0 : i32
    %c0_i32_2 = arith.constant 0 : i32
    return %c0_i32, %c0_i32_0, %c0_i32_1 : i32, i32, i32
  }
  func.func @transform_6(%arg0: i32, %arg1: i32, %arg2: i32) -> (i32, i32, i32) {
    %c0_i32 = arith.constant 0 : i32
    %c0_i32_0 = arith.constant 0 : i32
    %c0_i32_1 = arith.constant 0 : i32
    %c0_i32_2 = arith.constant 0 : i32
    return %c0_i32, %c0_i32_0, %c0_i32_1 : i32, i32, i32
  }
  func.func @transform_7(%arg0: i32, %arg1: i32, %arg2: i32) -> (i32, i32, i32) {
    %c0_i32 = arith.constant 0 : i32
    %c0_i32_0 = arith.constant 0 : i32
    %c0_i32_1 = arith.constant 0 : i32
    %c0_i32_2 = arith.constant 0 : i32
    return %c0_i32, %c0_i32_0, %c0_i32_1 : i32, i32, i32
  }
  func.func @transform_8(%arg0: i32, %arg1: i32, %arg2: i32) -> (i32, i32, i32) {
    %c0_i32 = arith.constant 0 : i32
    %c0_i32_0 = arith.constant 0 : i32
    %c0_i32_1 = arith.constant 0 : i32
    %c0_i32_2 = arith.constant 0 : i32
    return %c0_i32, %c0_i32_0, %c0_i32_1 : i32, i32, i32
  }
  func.func @transform_9(%arg0: i32, %arg1: i32, %arg2: i32) -> (i32, i32) {
    %c0_i32 = arith.constant 0 : i32
    %c0_i32_0 = arith.constant 0 : i32
    %c0_i32_1 = arith.constant 0 : i32
    return %c0_i32, %c0_i32_0 : i32, i32
  }
  func.func @transform_10(%arg0: i32, %arg1: i32, %arg2: i32) -> (i32, i32) {
    %c0_i32 = arith.constant 0 : i32
    %c0_i32_0 = arith.constant 0 : i32
    %c0_i32_1 = arith.constant 0 : i32
    return %c0_i32, %c0_i32_0 : i32, i32
  }
  func.func @transform_11(%arg0: i32, %arg1: i32, %arg2: i32) -> (i32, i32) {
    %c0_i32 = arith.constant 0 : i32
    %c0_i32_0 = arith.constant 0 : i32
    %c0_i32_1 = arith.constant 0 : i32
    return %c0_i32, %c0_i32_0 : i32, i32
  }
  func.func @transform_12(%arg0: i32, %arg1: i32, %arg2: i32) -> (i32, i32, i32) {
    %c0_i32 = arith.constant 0 : i32
    %c0_i32_0 = arith.constant 0 : i32
    return %arg0, %arg1, %c0_i32 : i32, i32, i32
  }
}

</mosaic_0001>

<llo_original>
// kernel: tpu_custom_call.1
$region0: #{tpu_custom_call.1}
  #allocation0 [shape = 'u32[]', space=smem, size = 0x4, offset = 0x4, fixed_abs, tag = 'smem constant byte address 0x4 - core index']
  #allocation1 [shape = 'u32[144,128]{1,0:T(1,128)}', space=vmem, size = 0x12000, scoped, tag = 'internal scratch']
  #allocation2 [shape = 'f32[8,32]{1,0:T(8,128)}', space=vmem, size = 0x1000, scoped, tag = 'scratch operand']
  %s0 = inlined_call_operand.hbm [shape: f32[2,8,32], index: 0, kind: input, shape index: {}]
  %s1 = inlined_call_operand.hbm [shape: f32[2,8,32], index: 1, kind: input, shape index: {}]
  %s2 = inlined_call_operand.hbm [shape: f32[1,32,32], index: 2, kind: input, shape index: {}]
  %s3 = inlined_call_operand.hbm [shape: f32[1,32,32], index: 3, kind: input, shape index: {}]
  %s4 = inlined_call_operand.hbm [shape: f32[1,32,32], index: 4, kind: input, shape index: {}]
  %s5 = inlined_call_operand.hbm [shape: f32[1,32,32], index: 5, kind: input, shape index: {}]
  %s6 = inlined_call_operand.vmem [shape: f32[1,1,32], index: 6, kind: input, shape index: {}]
  %s7 = inlined_call_operand.vmem [shape: f32[1,1,32], index: 7, kind: input, shape index: {}]
  %s8 = inlined_call_operand.vmem [shape: f32[1,1,32], index: 8, kind: input, shape index: {}]
  %s9 = inlined_call_operand.vmem [shape: f32[1,32], index: 9, kind: input, shape index: {}]
  %s10 = inlined_call_operand.vmem [shape: f32[1,32], index: 10, kind: input, shape index: {}]
  %s11 = inlined_call_operand.vmem [shape: f32[1,32], index: 11, kind: input, shape index: {}]
  %s12 = inlined_call_operand.hbm [shape: f32[2,8,32], index: 12, kind: output, shape index: {}]
  %s13 = sld [smem:[#allocation0]]
  $region113: #{tpu_custom_call.1} parent=0
    _
  %s15 = ssub.s32 1, %s13
  %s16 = scalar_select 0, %s15, %s13
  $region1: #{tpu_custom_call.1} parent=0
    #allocation3 [shape = 'u8[8192]{0}', space=vmem, size = 0x2000, scoped, tag = 'input window, operand 0']
    #allocation4 [shape = 's32[2]{0}', space=sflag, size = 0x8, scoped, tag = 'scoped memory for tpu_custom_call.1']
    #allocation5 [shape = 's32[2]{0}', space=sflag, size = 0x8, scoped, tag = 'scoped memory for tpu_custom_call.1']
    #allocation6 [shape = 'u8[8192]{0}', space=vmem, size = 0x2000, scoped, tag = 'input window, operand 1']
    #allocation7 [shape = 's32[2]{0}', space=sflag, size = 0x8, scoped, tag = 'scoped memory for tpu_custom_call.1']
    #allocation8 [shape = 'u8[16384]{0}', space=vmem, size = 0x4000, scoped, tag = 'input window, operand 2, single buffered']
    #allocation9 [shape = 'u8[16384]{0}', space=vmem, size = 0x4000, scoped, tag = 'input window, operand 3, single buffered']
    #allocation10 [shape = 's32[1]{0}', space=sflag, size = 0x4, scoped, tag = 'scoped memory for tpu_custom_call.1']
    #allocation11 [shape = 'u8[16384]{0}', space=vmem, size = 0x4000, scoped, tag = 'input window, operand 4, single buffered']
    #allocation12 [shape = 'u8[16384]{0}', space=vmem, size = 0x4000, scoped, tag = 'input window, operand 5, single buffered']
    #allocation13 [shape = 's32[1]{0}', space=sflag, size = 0x4, scoped, tag = 'scoped memory for tpu_custom_call.1']
    #allocation14 [shape = 'u8[8192]{0}', space=vmem, size = 0x2000, scoped, tag = 'output window, operand 0']
    %17 = vsyncpa [#allocation4], 0
    %s18 = scalar_lea.sflag [#allocation4], 1
    %19 = vsyncpa %s18, 0
    %20 = vsyncpa [#allocation7], 0
    %s21 = scalar_lea.sflag [#allocation7], 1
    %22 = vsyncpa %s21, 0
    %23 = vsyncpa [#allocation10], 0
    %24 = vsyncpa [#allocation13], 0
    %25 = vsyncpa [#allocation5], 0
    %s26 = scalar_lea.sflag [#allocation5], 1
    %27 = vsyncpa %s26, 0
    loop: start=0, step=1, limit=4
    $region2: #{tpu_custom_call.1} parent=1 // loop_pre_header
      _
    $region3: #{tpu_custom_call.1} parent=1 // loop_header
      %s29 = sphi 0, %s33
      %p30 = scmp.ge.s32.totalorder %s29, 4
      %s36 = sphi 0, %s55
      %s37 = sphi 0, %s51
      %s38 = sphi 0, %s47
      %s39 = sphi 0, %s36
      %s40 = sphi 0, %s37
      %s41 = sphi 0, %s38
      %s42 = sphi 0, %s39
      %s43 = sphi 0, %s40
      %s44 = sphi 0, %s41
      %s60 = sphi 0, %s62
      %s63 = sphi 0, %s60
      %s64 = sphi 0, %s63
      %s80 = sphi 0, %s64
      %s86 = sphi 0, %s88
      %s89 = sphi 0, %s86
      %s90 = sphi 0, %s89
      %s106 = sphi 0, %s90
      %s110 = sphi 0, %s110
      %s112 = sphi 0, %s110
      %s113 = sphi 0, %s112
      %s127 = sphi 0, %s113
      %s131 = sphi 0, %s131
      %s133 = sphi 0, %s131
      %s134 = sphi 0, %s133
      %s148 = sphi 0, %s134
      %s152 = sphi 0, %s152
      %s154 = sphi 0, %s152
      %s155 = sphi 0, %s154
      %s169 = sphi 0, %s155
      %s173 = sphi 0, %s173
      %s175 = sphi 0, %s173
      %s176 = sphi 0, %s175
      %s190 = sphi 0, %s176
      %s194 = sphi 0, %s194
      %s196 = sphi 0, %s194
      %s197 = sphi 0, %s196
      %s211 = sphi 0, %s197
      %s215 = sphi 0, %s215
      %s217 = sphi 0, %s215
      %s218 = sphi 0, %s217
      %s232 = sphi 0, %s218
      %s236 = sphi 0, %s236
      %s238 = sphi 0, %s236
      %s239 = sphi 0, %s238
      %s253 = sphi 0, %s239
      %s257 = sphi 0, %s257
      %s259 = sphi 0, %s257
      %s260 = sphi 0, %s259
      %s274 = sphi 0, %s260
      %s278 = sphi 0, %s278
      %s280 = sphi 0, %s278
      %s281 = sphi 0, %s280
      %s295 = sphi 0, %s281
      %s299 = sphi 0, %s299
      %s301 = sphi 0, %s299
      %s302 = sphi 0, %s301
      %s316 = sphi 0, %s302
      %s324 = sphi 0, %s326
      %s327 = sphi 0, %s324
      %s328 = sphi 0, %s327
      %s344 = sphi 0, %s328
    $region4: #{tpu_custom_call.1} parent=1 // loop_header_branch
      %32 = sbr.rel (%p30) target = $region8
    $region5: #{tpu_custom_call.1} parent=1 // loop_body
      %s34 = ssub.s32 %s29, 1
      %s35 = ssub.s32 %s29, 2
      %s45 = sadd.s32 1, %s38
      %p46 = scmp.ge.s32.totalorder %s45, 1
      %s47 = scalar_select %p46, 0, %s45
      %s48 = sadd.s32 1, %s37
      %s49 = scalar_select %p46, %s48, %s37
      %p50 = scmp.ge.s32.totalorder %s49, 1
      %s51 = scalar_select %p50, 0, %s49
      %s52 = sadd.s32 1, %s36
      %s53 = scalar_select %p50, %s52, %s36
      %p54 = scmp.ge.s32.totalorder %s53, 2
      %s55 = scalar_select %p54, 0, %s53
      %s56 = ssub.s32 %s36, %s55
      %s57 = ssub.s32 %s37, %s51
      %s58 = sor.u32 %s56, %s57
      %p59 = scmp.eq.s32.totalorder %s58, 0
      %s61 = sadd.s32 %s60, 1
      %s62 = scalar_select %p59, %s60, %s61
      %p65 = pneg %p59
      %p66 = scmp.eq.s32.totalorder %s29, 1
      %p67 = por %p65, %p66
      %p68 = scmp.ne.s32.totalorder %s60, %s63
      %p69 = scmp.eq.s32.totalorder %s29, 0
      %p70 = por %p68, %p69
      %p71 = scmp.ne.s32.totalorder %s60, %s63
      %p72 = scmp.eq.s32.totalorder %s34, 1
      %p73 = por %p71, %p72
      %p74 = scmp.ne.s32.totalorder %s63, %s64
      %p75 = scmp.eq.s32.totalorder %s34, 0
      %p76 = por %p74, %p75
      %p77 = scmp.ne.s32.totalorder %s63, %s64
      %p78 = scmp.eq.s32.totalorder %s35, 1
      %p79 = por %p77, %p78
      %p81 = scmp.ne.s32.totalorder %s64, %s80
      %p82 = scmp.eq.s32.totalorder %s35, 0
      %p83 = por %p81, %p82
      %s84 = ssub.s32 %s36, %s55
      %p85 = scmp.eq.s32.totalorder %s84, 0
      %s87 = sadd.s32 %s86, 1
      %s88 = scalar_select %p85, %s86, %s87
      %p91 = pneg %p85
      %p92 = scmp.eq.s32.totalorder %s29, 1
      %p93 = por %p91, %p92
      %p94 = scmp.ne.s32.totalorder %s86, %s89
      %p95 = scmp.eq.s32.totalorder %s29, 0
      %p96 = por %p94, %p95
      %p97 = scmp.ne.s32.totalorder %s86, %s89
      %p98 = scmp.eq.s32.totalorder %s34, 1
      %p99 = por %p97, %p98
      %p100 = scmp.ne.s32.totalorder %s89, %s90
      %p101 = scmp.eq.s32.totalorder %s34, 0
      %p102 = por %p100, %p101
      %p103 = scmp.ne.s32.totalorder %s89, %s90
      %p104 = scmp.eq.s32.totalorder %s35, 1
      %p105 = por %p103, %p104
      %p107 = scmp.ne.s32.totalorder %s90, %s106
      %p108 = scmp.eq.s32.totalorder %s35, 0
      %p109 = por %p107, %p108
      %s111 = sadd.s32 %s110, 1
      %p114 = scmp.eq.s32.totalorder %s29, 1
      %p115 = scmp.ne.s32.totalorder %s110, %s112
      %p116 = scmp.eq.s32.totalorder %s29, 0
      %p117 = por %p115, %p116
      %p118 = scmp.ne.s32.totalorder %s110, %s112
      %p119 = scmp.eq.s32.totalorder %s34, 1
      %p120 = por %p118, %p119
      %p121 = scmp.ne.s32.totalorder %s112, %s113
      %p122 = scmp.eq.s32.totalorder %s34, 0
      %p123 = por %p121, %p122
      %p124 = scmp.ne.s32.totalorder %s112, %s113
      %p125 = scmp.eq.s32.totalorder %s35, 1
      %p126 = por %p124, %p125
      %p128 = scmp.ne.s32.totalorder %s113, %s127
      %p129 = scmp.eq.s32.totalorder %s35, 0
      %p130 = por %p128, %p129
      %s132 = sadd.s32 %s131, 1
      %p135 = scmp.eq.s32.totalorder %s29, 1
      %p136 = scmp.ne.s32.totalorder %s131, %s133
      %p137 = scmp.eq.s32.totalorder %s29, 0
      %p138 = por %p136, %p137
      %p139 = scmp.ne.s32.totalorder %s131, %s133
      %p140 = scmp.eq.s32.totalorder %s34, 1
      %p141 = por %p139, %p140
      %p142 = scmp.ne.s32.totalorder %s133, %s134
      %p143 = scmp.eq.s32.totalorder %s34, 0
      %p144 = por %p142, %p143
      %p145 = scmp.ne.s32.totalorder %s133, %s134
      %p146 = scmp.eq.s32.totalorder %s35, 1
      %p147 = por %p145, %p146
      %p149 = scmp.ne.s32.totalorder %s134, %s148
      %p150 = scmp.eq.s32.totalorder %s35, 0
      %p151 = por %p149, %p150
      %s153 = sadd.s32 %s152, 1
      %p156 = scmp.eq.s32.totalorder %s29, 1
      %p157 = scmp.ne.s32.totalorder %s152, %s154
      %p158 = scmp.eq.s32.totalorder %s29, 0
      %p159 = por %p157, %p158
      %p160 = scmp.ne.s32.totalorder %s152, %s154
      %p161 = scmp.eq.s32.totalorder %s34, 1
      %p162 = por %p160, %p161
      %p163 = scmp.ne.s32.totalorder %s154, %s155
      %p164 = scmp.eq.s32.totalorder %s34, 0
      %p165 = por %p163, %p164
      %p166 = scmp.ne.s32.totalorder %s154, %s155
      %p167 = scmp.eq.s32.totalorder %s35, 1
      %p168 = por %p166, %p167
      %p170 = scmp.ne.s32.totalorder %s155, %s169
      %p171 = scmp.eq.s32.totalorder %s35, 0
      %p172 = por %p170, %p171
      %s174 = sadd.s32 %s173, 1
      %p177 = scmp.eq.s32.totalorder %s29, 1
      %p178 = scmp.ne.s32.totalorder %s173, %s175
      %p179 = scmp.eq.s32.totalorder %s29, 0
      %p180 = por %p178, %p179
      %p181 = scmp.ne.s32.totalorder %s173, %s175
      %p182 = scmp.eq.s32.totalorder %s34, 1
      %p183 = por %p181, %p182
      %p184 = scmp.ne.s32.totalorder %s175, %s176
      %p185 = scmp.eq.s32.totalorder %s34, 0
      %p186 = por %p184, %p185
      %p187 = scmp.ne.s32.totalorder %s175, %s176
      %p188 = scmp.eq.s32.totalorder %s35, 1
      %p189 = por %p187, %p188
      %p191 = scmp.ne.s32.totalorder %s176, %s190
      %p192 = scmp.eq.s32.totalorder %s35, 0
      %p193 = por %p191, %p192
      %s195 = sadd.s32 %s194, 1
      %p198 = scmp.eq.s32.totalorder %s29, 1
      %p199 = scmp.ne.s32.totalorder %s194, %s196
      %p200 = scmp.eq.s32.totalorder %s29, 0
      %p201 = por %p199, %p200
      %p202 = scmp.ne.s32.totalorder %s194, %s196
      %p203 = scmp.eq.s32.totalorder %s34, 1
      %p204 = por %p202, %p203
      %p205 = scmp.ne.s32.totalorder %s196, %s197
      %p206 = scmp.eq.s32.totalorder %s34, 0
      %p207 = por %p205, %p206
      %p208 = scmp.ne.s32.totalorder %s196, %s197
      %p209 = scmp.eq.s32.totalorder %s35, 1
      %p210 = por %p208, %p209
      %p212 = scmp.ne.s32.totalorder %s197, %s211
      %p213 = scmp.eq.s32.totalorder %s35, 0
      %p214 = por %p212, %p213
      %s216 = sadd.s32 %s215, 1
      %p219 = scmp.eq.s32.totalorder %s29, 1
      %p220 = scmp.ne.s32.totalorder %s215, %s217
      %p221 = scmp.eq.s32.totalorder %s29, 0
      %p222 = por %p220, %p221
      %p223 = scmp.ne.s32.totalorder %s215, %s217
      %p224 = scmp.eq.s32.totalorder %s34, 1
      %p225 = por %p223, %p224
      %p226 = scmp.ne.s32.totalorder %s217, %s218
      %p227 = scmp.eq.s32.totalorder %s34, 0
      %p228 = por %p226, %p227
      %p229 = scmp.ne.s32.totalorder %s217, %s218
      %p230 = scmp.eq.s32.totalorder %s35, 1
      %p231 = por %p229, %p230
      %p233 = scmp.ne.s32.totalorder %s218, %s232
      %p234 = scmp.eq.s32.totalorder %s35, 0
      %p235 = por %p233, %p234
      %s237 = sadd.s32 %s236, 1
      %p240 = scmp.eq.s32.totalorder %s29, 1
      %p241 = scmp.ne.s32.totalorder %s236, %s238
      %p242 = scmp.eq.s32.totalorder %s29, 0
      %p243 = por %p241, %p242
      %p244 = scmp.ne.s32.totalorder %s236, %s238
      %p245 = scmp.eq.s32.totalorder %s34, 1
      %p246 = por %p244, %p245
      %p247 = scmp.ne.s32.totalorder %s238, %s239
      %p248 = scmp.eq.s32.totalorder %s34, 0
      %p249 = por %p247, %p248
      %p250 = scmp.ne.s32.totalorder %s238, %s239
      %p251 = scmp.eq.s32.totalorder %s35, 1
      %p252 = por %p250, %p251
      %p254 = scmp.ne.s32.totalorder %s239, %s253
      %p255 = scmp.eq.s32.totalorder %s35, 0
      %p256 = por %p254, %p255
      %s258 = sadd.s32 %s257, 1
      %p261 = scmp.eq.s32.totalorder %s29, 1
      %p262 = scmp.ne.s32.totalorder %s257, %s259
      %p263 = scmp.eq.s32.totalorder %s29, 0
      %p264 = por %p262, %p263
      %p265 = scmp.ne.s32.totalorder %s257, %s259
      %p266 = scmp.eq.s32.totalorder %s34, 1
      %p267 = por %p265, %p266
      %p268 = scmp.ne.s32.totalorder %s259, %s260
      %p269 = scmp.eq.s32.totalorder %s34, 0
      %p270 = por %p268, %p269
      %p271 = scmp.ne.s32.totalorder %s259, %s260
      %p272 = scmp.eq.s32.totalorder %s35, 1
      %p273 = por %p271, %p272
      %p275 = scmp.ne.s32.totalorder %s260, %s274
      %p276 = scmp.eq.s32.totalorder %s35, 0
      %p277 = por %p275, %p276
      %s279 = sadd.s32 %s278, 1
      %p282 = scmp.eq.s32.totalorder %s29, 1
      %p283 = scmp.ne.s32.totalorder %s278, %s280
      %p284 = scmp.eq.s32.totalorder %s29, 0
      %p285 = por %p283, %p284
      %p286 = scmp.ne.s32.totalorder %s278, %s280
      %p287 = scmp.eq.s32.totalorder %s34, 1
      %p288 = por %p286, %p287
      %p289 = scmp.ne.s32.totalorder %s280, %s281
      %p290 = scmp.eq.s32.totalorder %s34, 0
      %p291 = por %p289, %p290
      %p292 = scmp.ne.s32.totalorder %s280, %s281
      %p293 = scmp.eq.s32.totalorder %s35, 1
      %p294 = por %p292, %p293
      %p296 = scmp.ne.s32.totalorder %s281, %s295
      %p297 = scmp.eq.s32.totalorder %s35, 0
      %p298 = por %p296, %p297
      %s300 = sadd.s32 %s299, 1
      %p303 = scmp.eq.s32.totalorder %s29, 1
      %p304 = scmp.ne.s32.totalorder %s299, %s301
      %p305 = scmp.eq.s32.totalorder %s29, 0
      %p306 = por %p304, %p305
      %p307 = scmp.ne.s32.totalorder %s299, %s301
      %p308 = scmp.eq.s32.totalorder %s34, 1
      %p309 = por %p307, %p308
      %p310 = scmp.ne.s32.totalorder %s301, %s302
      %p311 = scmp.eq.s32.totalorder %s34, 0
      %p312 = por %p310, %p311
      %p313 = scmp.ne.s32.totalorder %s301, %s302
      %p314 = scmp.eq.s32.totalorder %s35, 1
      %p315 = por %p313, %p314
      %p317 = scmp.ne.s32.totalorder %s302, %s316
      %p318 = scmp.eq.s32.totalorder %s35, 0
      %p319 = por %p317, %p318
      %s320 = ssub.s32 %s36, %s55
      %s321 = ssub.s32 %s37, %s51
      %s322 = sor.u32 %s320, %s321
      %p323 = scmp.eq.s32.totalorder %s322, 0
      %s325 = sadd.s32 %s324, 1
      %s326 = scalar_select %p323, %s324, %s325
      %p329 = pneg %p323
      %p330 = scmp.eq.s32.totalorder %s29, 1
      %p331 = por %p329, %p330
      %p332 = scmp.ne.s32.totalorder %s324, %s327
      %p333 = scmp.eq.s32.totalorder %s29, 0
      %p334 = por %p332, %p333
      %p335 = scmp.ne.s32.totalorder %s324, %s327
      %p336 = scmp.eq.s32.totalorder %s34, 1
      %p337 = por %p335, %p336
      %p338 = scmp.ne.s32.totalorder %s327, %s328
      %p339 = scmp.eq.s32.totalorder %s34, 0
      %p340 = por %p338, %p339
      %p341 = scmp.ne.s32.totalorder %s327, %s328
      %p342 = scmp.eq.s32.totalorder %s35, 1
      %p343 = por %p341, %p342
      %p345 = scmp.ne.s32.totalorder %s328, %s344
      %p346 = scmp.eq.s32.totalorder %s35, 0
      %p347 = por %p345, %p346
      %p348 = scmp.le.s32.totalorder 1, %s29
      %p349 = scmp.lt.s32.totalorder %s29, 3
      %p350 = pnand %p348, %p349
      %p351 = pneg %p350
      // Predicated region
      $region9: #{tpu_custom_call.1} parent=5 // pred_check
        _
      $region10: #{tpu_custom_call.1} parent=5 // pred_check_branch
        %353 = sbr.rel (%p350) target = $region12
      $region11: #{tpu_custom_call.1} parent=5 // pred_region
        %s354 = ssub.s32 %s29, 1
        // Predicated region
        $region13: #{tpu_custom_call.1} parent=11 // pred_check
          %p355 = pneg %p123
        $region14: #{tpu_custom_call.1} parent=11 // pred_check_branch
          %357 = sbr.rel (%p355) target = $region16
        $region15: #{tpu_custom_call.1} parent=11 // pred_region
          %s359 = ssub.s32 512, 512
          %360 = vsyncadd [#allocation7], %s359
          %s361 = sshll.u32 [#allocation8], 4
          %s362 = int_to_ptr.vmem [resolvable:$true] %s361
          %367 = dma.hbm_to_vmem [thread:$0]  %s2, 512, %s362, [#allocation7], 128, 128, 8
        $region16: #{tpu_custom_call.1} parent=11 // pred_fallthru
          _
        // Predicated region
        $region17: #{tpu_custom_call.1} parent=11 // pred_check
          %p368 = pneg %p144
        $region18: #{tpu_custom_call.1} parent=11 // pred_check_branch
          %370 = sbr.rel (%p368) target = $region20
        $region19: #{tpu_custom_call.1} parent=11 // pred_region
          %s372 = ssub.s32 512, 512
          %373 = vsyncadd [#allocation10], %s372
          %s374 = sshll.u32 [#allocation9], 4
          %s375 = int_to_ptr.vmem [resolvable:$true] %s374
          %380 = dma.hbm_to_vmem [thread:$0]  %s3, 512, %s375, [#allocation10], 128, 128, 8
        $region20: #{tpu_custom_call.1} parent=11 // pred_fallthru
          _
        // Predicated region
        $region21: #{tpu_custom_call.1} parent=11 // pred_check
          %p381 = pneg %p165
        $region22: #{tpu_custom_call.1} parent=11 // pred_check_branch
          %383 = sbr.rel (%p381) target = $region24
        $region23: #{tpu_custom_call.1} parent=11 // pred_region
          %s385 = ssub.s32 512, 512
          %386 = vsyncadd [#allocation10], %s385
          %s387 = sshll.u32 [#allocation11], 4
          %s388 = int_to_ptr.vmem [resolvable:$true] %s387
          %393 = dma.hbm_to_vmem [thread:$0]  %s4, 512, %s388, [#allocation10], 128, 128, 8
        $region24: #{tpu_custom_call.1} parent=11 // pred_fallthru
          _
        // Predicated region
        $region25: #{tpu_custom_call.1} parent=11 // pred_check
          %p394 = pneg %p186
        $region26: #{tpu_custom_call.1} parent=11 // pred_check_branch
          %396 = sbr.rel (%p394) target = $region28
        $region27: #{tpu_custom_call.1} parent=11 // pred_region
          %s398 = ssub.s32 512, 512
          %399 = vsyncadd [#allocation13], %s398
          %s400 = sshll.u32 [#allocation12], 4
          %s401 = int_to_ptr.vmem [resolvable:$true] %s400
          %406 = dma.hbm_to_vmem [thread:$0]  %s5, 512, %s401, [#allocation13], 128, 128, 8
        $region28: #{tpu_custom_call.1} parent=11 // pred_fallthru
          _
        // Predicated region
        $region29: #{tpu_custom_call.1} parent=11 // pred_check
          %p407 = pneg %p207
        $region30: #{tpu_custom_call.1} parent=11 // pred_check_branch
          %409 = sbr.rel (%p407) target = $region32
        $region31: #{tpu_custom_call.1} parent=11 // pred_region
          _
        $region32: #{tpu_custom_call.1} parent=11 // pred_fallthru
          _
        // Predicated region
        $region33: #{tpu_custom_call.1} parent=11 // pred_check
          %p410 = pneg %p228
        $region34: #{tpu_custom_call.1} parent=11 // pred_check_branch
          %412 = sbr.rel (%p410) target = $region36
        $region35: #{tpu_custom_call.1} parent=11 // pred_region
          _
        $region36: #{tpu_custom_call.1} parent=11 // pred_fallthru
          _
        // Predicated region
        $region37: #{tpu_custom_call.1} parent=11 // pred_check
          %p413 = pneg %p249
        $region38: #{tpu_custom_call.1} parent=11 // pred_check_branch
          %415 = sbr.rel (%p413) target = $region40
        $region39: #{tpu_custom_call.1} parent=11 // pred_region
          _
        $region40: #{tpu_custom_call.1} parent=11 // pred_fallthru
          _
        // Predicated region
        $region41: #{tpu_custom_call.1} parent=11 // pred_check
          %p416 = pneg %p270
        $region42: #{tpu_custom_call.1} parent=11 // pred_check_branch
          %418 = sbr.rel (%p416) target = $region44
        $region43: #{tpu_custom_call.1} parent=11 // pred_region
          _
        $region44: #{tpu_custom_call.1} parent=11 // pred_fallthru
          _
        // Predicated region
        $region45: #{tpu_custom_call.1} parent=11 // pred_check
          %p419 = pneg %p291
        $region46: #{tpu_custom_call.1} parent=11 // pred_check_branch
          %421 = sbr.rel (%p419) target = $region48
        $region47: #{tpu_custom_call.1} parent=11 // pred_region
          _
        $region48: #{tpu_custom_call.1} parent=11 // pred_fallthru
          _
        // Predicated region
        $region49: #{tpu_custom_call.1} parent=11 // pred_check
          %p422 = pneg %p312
        $region50: #{tpu_custom_call.1} parent=11 // pred_check_branch
          %424 = sbr.rel (%p422) target = $region52
        $region51: #{tpu_custom_call.1} parent=11 // pred_region
          _
        $region52: #{tpu_custom_call.1} parent=11 // pred_fallthru
          _
      $region12: #{tpu_custom_call.1} parent=5 // pred_fallthru
        _
      %p425 = scmp.lt.s32.totalorder %s29, 2
      // Predicated region
      $region53: #{tpu_custom_call.1} parent=5 // pred_check
        %p426 = pneg %p425
      $region54: #{tpu_custom_call.1} parent=5 // pred_check_branch
        %428 = sbr.rel (%p426) target = $region56
      $region55: #{tpu_custom_call.1} parent=5 // pred_region
        // Predicated region
        $region57: #{tpu_custom_call.1} parent=55 // pred_check
          %p429 = pneg %p70
        $region58: #{tpu_custom_call.1} parent=55 // pred_check_branch
          %431 = sbr.rel (%p429) target = $region60
        $region59: #{tpu_custom_call.1} parent=55 // pred_region
          %s432 = sand.u32 %s60, 1
          %s433 = scalar_lea.sflag [#allocation4], %s432
          %s434 = sand.u32 %s60, 1
          %s435 = smul.addr %s434, 8
          %s436 = scalar_lea.vmem [#allocation3], %s435
          %s438 = ssub.s32 128, 128
          %439 = vsyncadd %s433, %s438
          %s440 = sadd.s32 %s37, %s36
          %s441 = smul.addr %s440, 128
          %s442 = scalar_lea.hbm %s0, %s441
          %s444 = sshll.u32 %s436, 4
          %s445 = int_to_ptr.vmem [resolvable:$true] %s444
          %447 = dma.hbm_to_vmem [thread:$0]  %s442, 128, %s445, %s433
        $region60: #{tpu_custom_call.1} parent=55 // pred_fallthru
          _
        // Predicated region
        $region61: #{tpu_custom_call.1} parent=55 // pred_check
          %p448 = pneg %p96
        $region62: #{tpu_custom_call.1} parent=55 // pred_check_branch
          %450 = sbr.rel (%p448) target = $region64
        $region63: #{tpu_custom_call.1} parent=55 // pred_region
          %s451 = sand.u32 %s29, 1
          %s452 = scalar_lea.sflag [#allocation7], %s451
          %s453 = sand.u32 %s86, 1
          %s454 = smul.addr %s453, 8
          %s455 = scalar_lea.vmem [#allocation6], %s454
          %s457 = ssub.s32 128, 128
          %458 = vsyncadd %s452, %s457
          %s459 = smul.addr %s36, 128
          %s460 = scalar_lea.hbm %s1, %s459
          %s462 = sshll.u32 %s455, 4
          %s463 = int_to_ptr.vmem [resolvable:$true] %s462
          %465 = dma.hbm_to_vmem [thread:$0]  %s460, 128, %s463, %s452
        $region64: #{tpu_custom_call.1} parent=55 // pred_fallthru
          _
      $region56: #{tpu_custom_call.1} parent=5 // pred_fallthru
        _
      %p466 = scmp.le.s32.totalorder 1, %s29
      %p467 = scmp.lt.s32.totalorder %s29, 3
      %p468 = pnand %p466, %p467
      %p469 = pneg %p468
      // Predicated region
      $region65: #{tpu_custom_call.1} parent=5 // pred_check
        _
      $region66: #{tpu_custom_call.1} parent=5 // pred_check_branch
        %471 = sbr.rel (%p468) target = $region68
      $region67: #{tpu_custom_call.1} parent=5 // pred_region
        %s472 = ssub.s32 %s29, 1
        %s473 = sand.u32 %s63, 1
        %s474 = scalar_lea.sflag [#allocation4], %s473
        %s475 = sand.u32 %s63, 1
        %s476 = smul.addr %s475, 8
        %s477 = scalar_lea.vmem [#allocation3], %s476
        // Predicated region
        $region69: #{tpu_custom_call.1} parent=67 // pred_check
          %p478 = pneg %p76
        $region70: #{tpu_custom_call.1} parent=67 // pred_check_branch
          %480 = sbr.rel (%p478) target = $region72
        $region71: #{tpu_custom_call.1} parent=67 // pred_region
          %481 = dma.done %s474, 128
        $region72: #{tpu_custom_call.1} parent=67 // pred_fallthru
          _
        %s482 = sand.u32 %s34, 1
        %s483 = scalar_lea.sflag [#allocation7], %s482
        %s484 = sand.u32 %s89, 1
        %s485 = smul.addr %s484, 8
        %s486 = scalar_lea.vmem [#allocation6], %s485
        // Predicated region
        $region73: #{tpu_custom_call.1} parent=67 // pred_check
          %p487 = pneg %p102
        $region74: #{tpu_custom_call.1} parent=67 // pred_check_branch
          %489 = sbr.rel (%p487) target = $region76
        $region75: #{tpu_custom_call.1} parent=67 // pred_region
          %490 = dma.done %s483, 128
        $region76: #{tpu_custom_call.1} parent=67 // pred_fallthru
          _
        // Predicated region
        $region77: #{tpu_custom_call.1} parent=67 // pred_check
          %p491 = pneg %p123
        $region78: #{tpu_custom_call.1} parent=67 // pred_check_branch
          %493 = sbr.rel (%p491) target = $region80
        $region79: #{tpu_custom_call.1} parent=67 // pred_region
          %494 = dma.done [#allocation7], 512
        $region80: #{tpu_custom_call.1} parent=67 // pred_fallthru
          _
        // Predicated region
        $region81: #{tpu_custom_call.1} parent=67 // pred_check
          %p495 = pneg %p144
        $region82: #{tpu_custom_call.1} parent=67 // pred_check_branch
          %497 = sbr.rel (%p495) target = $region84
        $region83: #{tpu_custom_call.1} parent=67 // pred_region
          %498 = dma.done [#allocation10], 512
        $region84: #{tpu_custom_call.1} parent=67 // pred_fallthru
          _
        // Predicated region
        $region85: #{tpu_custom_call.1} parent=67 // pred_check
          %p499 = pneg %p165
        $region86: #{tpu_custom_call.1} parent=67 // pred_check_branch
          %501 = sbr.rel (%p499) target = $region88
        $region87: #{tpu_custom_call.1} parent=67 // pred_region
          %502 = dma.done [#allocation10], 512
        $region88: #{tpu_custom_call.1} parent=67 // pred_fallthru
          _
        // Predicated region
        $region89: #{tpu_custom_call.1} parent=67 // pred_check
          %p503 = pneg %p186
        $region90: #{tpu_custom_call.1} parent=67 // pred_check_branch
          %505 = sbr.rel (%p503) target = $region92
        $region91: #{tpu_custom_call.1} parent=67 // pred_region
          %506 = dma.done [#allocation13], 512
        $region92: #{tpu_custom_call.1} parent=67 // pred_fallthru
          _
        %s507 = sand.u32 %s63, 1
        %s508 = scalar_lea.sflag [#allocation4], %s507
        %s509 = sand.u32 %s63, 1
        %s510 = smul.addr %s509, 8
        %s511 = scalar_lea.vmem [#allocation3], %s510
        %p512 = pneg %p76
        %p513 = pneg %p73
        %s514 = sand.u32 %s34, 1
        %s515 = scalar_lea.sflag [#allocation7], %s514
        %s516 = sand.u32 %s89, 1
        %s517 = smul.addr %s516, 8
        %s518 = scalar_lea.vmem [#allocation6], %s517
        %p519 = pneg %p102
        %p520 = pneg %p99
        %p521 = pneg %p123
        %p522 = pneg %p120
        %p523 = pneg %p144
        %p524 = pneg %p141
        %p525 = pneg %p165
        %p526 = pneg %p162
        %p527 = pneg %p186
        %p528 = pneg %p183
        %p529 = pneg %p207
        %p530 = pneg %p204
        %p531 = pneg %p228
        %p532 = pneg %p225
        %p533 = pneg %p249
        %p534 = pneg %p246
        %p535 = pneg %p270
        %p536 = pneg %p267
        %p537 = pneg %p291
        %p538 = pneg %p288
        %p539 = pneg %p312
        %p540 = pneg %p309
        %p541 = pneg %p340
        %p542 = pneg %p337
        %s543 = sand.u32 %s327, 1
        %s544 = scalar_lea.sflag [#allocation5], %s543
        %s545 = sand.u32 %s327, 1
        %s546 = smul.addr %s545, 8
        %s547 = scalar_lea.vmem [#allocation14], %s546
        %p548 = scmp.eq.s32.totalorder %s41, 0
        // Predicated region
        $region93: #{tpu_custom_call.1} parent=67 // pred_check
          %p549 = pneg %p548
        $region94: #{tpu_custom_call.1} parent=67 // pred_check_branch
          %551 = sbr.rel (%p549) target = $region96
        $region95: #{tpu_custom_call.1} parent=67 // pred_region
          %vm552 = vcmask 261120
          %553 = vst.msk [vmem:[#allocation2] sm:$0xff] %vm552, 0.0
        $region96: #{tpu_custom_call.1} parent=67 // pred_fallthru
          _
        %v554 = vld [vmem:[%s477] sm:$0xff]
        %v555 = vld [vmem:[%s486] sm:$0xff]
        %s556 = smul.u32 %s41, 32
        %s557 = scalar_lea.vmem [#allocation8], %s556
        %v558 = vld [vmem:[%s557] sm:$0xff]
        %v559 = vld [vmem:[%s557 + $0x8] sm:$0xff]
        %v560 = vld [vmem:[%s557 + $0x10] sm:$0xff]
        %v561 = vld [vmem:[%s557 + $0x18] sm:$0xff]
        %s562 = scalar_lea.vmem [#allocation9], %s556
        %v563 = vld [vmem:[%s562] sm:$0xff]
        %v564 = vld [vmem:[%s562 + $0x8] sm:$0xff]
        %v565 = vld [vmem:[%s562 + $0x10] sm:$0xff]
        %v566 = vld [vmem:[%s562 + $0x18] sm:$0xff]
        %s567 = scalar_lea.vmem [#allocation11], %s556
        %v568 = vld [vmem:[%s567] sm:$0xff]
        %v569 = vld [vmem:[%s567 + $0x8] sm:$0xff]
        %v570 = vld [vmem:[%s567 + $0x10] sm:$0xff]
        %v571 = vld [vmem:[%s567 + $0x18] sm:$0xff]
        %s572 = scalar_lea.vmem [#allocation12], %s556
        %v573 = vld [vmem:[%s572] sm:$0xff]
        %v574 = vld [vmem:[%s572 + $0x8] sm:$0xff]
        %v575 = vld [vmem:[%s572 + $0x10] sm:$0xff]
        %v576 = vld [vmem:[%s572 + $0x18] sm:$0xff]
        %s577 = scalar_lea.vmem %s6, %s41
        %v578 = vld [vmem:[%s577] sm:$0x1]
        %s579 = scalar_lea.vmem %s7, %s41
        %v580 = vld [vmem:[%s579] sm:$0x1]
        %s581 = scalar_lea.vmem %s8, %s41
        %v582 = vld [vmem:[%s581] sm:$0x1]
        %v584 = vlaneseq
        %v585 = vshrl.u32 %v584, 7
        %v586 = vsub.s32 0, %v585
        %v587 = vrot.slane %v578, %v586
        %vm589 = vcmask 261120
        %v591 = vsel %vm589, %v554, 0
        %593 = vmatprep.subr.mxu0 0.0
        %594 = vmatpush1.msra.mxu0 %v558
        %595 = vmatprep.subr.mxu0 0.0
        %596 = vmatpush1.msra.mxu0 %v559
        %597 = vmatprep.subr.mxu0 0.0
        %598 = vmatpush1.msra.mxu0 %v560
        %599 = vmatprep.subr.mxu0 0.0
        %600 = vmatpush1.msra.mxu0 %v561
        %601 = vmatprep.subr.mxu0 0.0
        %602 = vmatpush1.msra.mxu0 0.0
        %603 = vmatprep.subr.mxu0 0.0
        %604 = vmatpush1.msra.mxu0 0.0
        %605 = vmatprep.subr.mxu0 0.0
        %606 = vmatpush1.msra.mxu0 0.0
        %607 = vmatprep.subr.mxu0 0.0
        %608 = vmatpush1.msra.mxu0 0.0
        %609 = vmatprep.subr.mxu0 0.0
        %610 = vmatpush1.msra.mxu0 0.0
        %611 = vmatprep.subr.mxu0 0.0
        %612 = vmatpush1.msra.mxu0 0.0
        %613 = vmatprep.subr.mxu0 0.0
        %614 = vmatpush1.msra.mxu0 0.0
        %615 = vmatprep.subr.mxu0 0.0
        %616 = vmatpush1.msra.mxu0 0.0
        %617 = vmatprep.subr.mxu0 0.0
        %618 = vmatpush1.msra.mxu0 0.0
        %619 = vmatprep.subr.mxu0 0.0
        %620 = vmatpush1.msra.mxu0 0.0
        %621 = vmatprep.subr.mxu0 0.0
        %622 = vmatpush1.msra.mxu0 0.0
        %623 = vmatprep.subr.mxu0 0.0
        %624 = vmatpush1.msra.mxu0 0.0
        %625 = vmatprep.subr.mxu0 0.0
        %626 = vmatpush1.msra.mxu0 0.0
        %627 = vmatprep.subr.mxu0 0.0
        %628 = vmatpush1.msra.mxu0 0.0
        %629 = vmatprep.subr.mxu0 0.0
        %630 = vmatpush1.msra.mxu0 0.0
        %631 = vmatprep.subr.mxu0 0.0
        %632 = vmatpush1.msra.mxu0 0.0
        %633 = vmatprep.subr.mxu0 0.0
        %634 = vmatpush1.msra.mxu0 0.0
        %635 = vmatprep.subr.mxu0 0.0
        %636 = vmatpush1.msra.mxu0 0.0
        %637 = vmatprep.subr.mxu0 0.0
        %638 = vmatpush1.msra.mxu0 0.0
        %639 = vmatprep.subr.mxu0 0.0
        %640 = vmatpush1.msra.mxu0 0.0
        %641 = vmatprep.subr.mxu0 0.0
        %642 = vmatpush1.msra.mxu0 0.0
        %643 = vmatprep.subr.mxu0 0.0
        %644 = vmatpush1.msra.mxu0 0.0
        %645 = vmatprep.subr.mxu0 0.0
        %646 = vmatpush1.msra.mxu0 0.0
        %647 = vmatprep.subr.mxu0 0.0
        %648 = vmatpush1.msra.mxu0 0.0
        %649 = vmatprep.subr.mxu0 0.0
        %650 = vmatpush1.msra.mxu0 0.0
        %651 = vmatprep.subr.mxu0 0.0
        %652 = vmatpush1.msra.mxu0 0.0
        %653 = vmatprep.subr.mxu0 0.0
        %654 = vmatpush1.msra.mxu0 0.0
        %655 = vmatprep.subr.mxu0 0.0
        %656 = vmatpush1.msra.mxu0 0.0
        %657 = vmatprep.mubr.f32.mxu0 0.0
        %658 = vmatmul.mubr.f32.gmra.mrb[0].mxu0 %v591
        %v659 = vpop.f32.mrb[0].mxu0
        %v660 = vadd.f32 %v587, %v659
        %v661 = vpop.f32.mrb[0].mxu0
        %662 = vdwg.mxu0
        %v664 = vlaneseq
        %v665 = vshrl.u32 %v664, 7
        %v666 = vsub.s32 0, %v665
        %v667 = vrot.slane %v580, %v666
        %v670 = vsel %vm589, %v555, 0
        %672 = vmatprep.subr.mxu0 0.0
        %673 = vmatpush1.msra.mxu0 %v563
        %674 = vmatprep.subr.mxu0 0.0
        %675 = vmatpush1.msra.mxu0 %v564
        %676 = vmatprep.subr.mxu0 0.0
        %677 = vmatpush1.msra.mxu0 %v565
        %678 = vmatprep.subr.mxu0 0.0
        %679 = vmatpush1.msra.mxu0 %v566
        %680 = vmatprep.subr.mxu0 0.0
        %681 = vmatpush1.msra.mxu0 0.0
        %682 = vmatprep.subr.mxu0 0.0
        %683 = vmatpush1.msra.mxu0 0.0
        %684 = vmatprep.subr.mxu0 0.0
        %685 = vmatpush1.msra.mxu0 0.0
        %686 = vmatprep.subr.mxu0 0.0
        %687 = vmatpush1.msra.mxu0 0.0
        %688 = vmatprep.subr.mxu0 0.0
        %689 = vmatpush1.msra.mxu0 0.0
        %690 = vmatprep.subr.mxu0 0.0
        %691 = vmatpush1.msra.mxu0 0.0
        %692 = vmatprep.subr.mxu0 0.0
        %693 = vmatpush1.msra.mxu0 0.0
        %694 = vmatprep.subr.mxu0 0.0
        %695 = vmatpush1.msra.mxu0 0.0
        %696 = vmatprep.subr.mxu0 0.0
        %697 = vmatpush1.msra.mxu0 0.0
        %698 = vmatprep.subr.mxu0 0.0
        %699 = vmatpush1.msra.mxu0 0.0
        %700 = vmatprep.subr.mxu0 0.0
        %701 = vmatpush1.msra.mxu0 0.0
        %702 = vmatprep.subr.mxu0 0.0
        %703 = vmatpush1.msra.mxu0 0.0
        %704 = vmatprep.subr.mxu0 0.0
        %705 = vmatpush1.msra.mxu0 0.0
        %706 = vmatprep.subr.mxu0 0.0
        %707 = vmatpush1.msra.mxu0 0.0
        %708 = vmatprep.subr.mxu0 0.0
        %709 = vmatpush1.msra.mxu0 0.0
        %710 = vmatprep.subr.mxu0 0.0
        %711 = vmatpush1.msra.mxu0 0.0
        %712 = vmatprep.subr.mxu0 0.0
        %713 = vmatpush1.msra.mxu0 0.0
        %714 = vmatprep.subr.mxu0 0.0
        %715 = vmatpush1.msra.mxu0 0.0
        %716 = vmatprep.subr.mxu0 0.0
        %717 = vmatpush1.msra.mxu0 0.0
        %718 = vmatprep.subr.mxu0 0.0
        %719 = vmatpush1.msra.mxu0 0.0
        %720 = vmatprep.subr.mxu0 0.0
        %721 = vmatpush1.msra.mxu0 0.0
        %722 = vmatprep.subr.mxu0 0.0
        %723 = vmatpush1.msra.mxu0 0.0
        %724 = vmatprep.subr.mxu0 0.0
        %725 = vmatpush1.msra.mxu0 0.0
        %726 = vmatprep.subr.mxu0 0.0
        %727 = vmatpush1.msra.mxu0 0.0
        %728 = vmatprep.subr.mxu0 0.0
        %729 = vmatpush1.msra.mxu0 0.0
        %730 = vmatprep.subr.mxu0 0.0
        %731 = vmatpush1.msra.mxu0 0.0
        %732 = vmatprep.subr.mxu0 0.0
        %733 = vmatpush1.msra.mxu0 0.0
        %734 = vmatprep.subr.mxu0 0.0
        %735 = vmatpush1.msra.mxu0 0.0
        %736 = vmatprep.mubr.f32.mxu0 0.0
        %737 = vmatmul.mubr.f32.gmra.mrb[0].mxu0 %v670
        %v738 = vpop.f32.mrb[0].mxu0
        %v739 = vadd.f32 %v667, %v738
        %v740 = vpop.f32.mrb[0].mxu0
        %741 = vdwg.mxu0
        %v743 = vlaneseq
        %v744 = vshrl.u32 %v743, 7
        %v745 = vsub.s32 0, %v744
        %v746 = vrot.slane %v582, %v745
        %748 = vmatprep.subr.mxu0 0.0
        %749 = vmatpush1.msra.mxu0 %v568
        %750 = vmatprep.subr.mxu0 0.0
        %751 = vmatpush1.msra.mxu0 %v569
        %752 = vmatprep.subr.mxu0 0.0
        %753 = vmatpush1.msra.mxu0 %v570
        %754 = vmatprep.subr.mxu0 0.0
        %755 = vmatpush1.msra.mxu0 %v571
        %756 = vmatprep.subr.mxu0 0.0
        %757 = vmatpush1.msra.mxu0 0.0
        %758 = vmatprep.subr.mxu0 0.0
        %759 = vmatpush1.msra.mxu0 0.0
        %760 = vmatprep.subr.mxu0 0.0
        %761 = vmatpush1.msra.mxu0 0.0
        %762 = vmatprep.subr.mxu0 0.0
        %763 = vmatpush1.msra.mxu0 0.0
        %764 = vmatprep.subr.mxu0 0.0
        %765 = vmatpush1.msra.mxu0 0.0
        %766 = vmatprep.subr.mxu0 0.0
        %767 = vmatpush1.msra.mxu0 0.0
        %768 = vmatprep.subr.mxu0 0.0
        %769 = vmatpush1.msra.mxu0 0.0
        %770 = vmatprep.subr.mxu0 0.0
        %771 = vmatpush1.msra.mxu0 0.0
        %772 = vmatprep.subr.mxu0 0.0
        %773 = vmatpush1.msra.mxu0 0.0
        %774 = vmatprep.subr.mxu0 0.0
        %775 = vmatpush1.msra.mxu0 0.0
        %776 = vmatprep.subr.mxu0 0.0
        %777 = vmatpush1.msra.mxu0 0.0
        %778 = vmatprep.subr.mxu0 0.0
        %779 = vmatpush1.msra.mxu0 0.0
        %780 = vmatprep.subr.mxu0 0.0
        %781 = vmatpush1.msra.mxu0 0.0
        %782 = vmatprep.subr.mxu0 0.0
        %783 = vmatpush1.msra.mxu0 0.0
        %784 = vmatprep.subr.mxu0 0.0
        %785 = vmatpush1.msra.mxu0 0.0
        %786 = vmatprep.subr.mxu0 0.0
        %787 = vmatpush1.msra.mxu0 0.0
        %788 = vmatprep.subr.mxu0 0.0
        %789 = vmatpush1.msra.mxu0 0.0
        %790 = vmatprep.subr.mxu0 0.0
        %791 = vmatpush1.msra.mxu0 0.0
        %792 = vmatprep.subr.mxu0 0.0
        %793 = vmatpush1.msra.mxu0 0.0
        %794 = vmatprep.subr.mxu0 0.0
        %795 = vmatpush1.msra.mxu0 0.0
        %796 = vmatprep.subr.mxu0 0.0
        %797 = vmatpush1.msra.mxu0 0.0
        %798 = vmatprep.subr.mxu0 0.0
        %799 = vmatpush1.msra.mxu0 0.0
        %800 = vmatprep.subr.mxu0 0.0
        %801 = vmatpush1.msra.mxu0 0.0
        %802 = vmatprep.subr.mxu0 0.0
        %803 = vmatpush1.msra.mxu0 0.0
        %804 = vmatprep.subr.mxu0 0.0
        %805 = vmatpush1.msra.mxu0 0.0
        %806 = vmatprep.subr.mxu0 0.0
        %807 = vmatpush1.msra.mxu0 0.0
        %808 = vmatprep.subr.mxu0 0.0
        %809 = vmatpush1.msra.mxu0 0.0
        %810 = vmatprep.subr.mxu0 0.0
        %811 = vmatpush1.msra.mxu0 0.0
        %812 = vmatprep.mubr.f32.mxu0 0.0
        %813 = vmatmul.mubr.f32.gmra.mrb[0].mxu0 %v670
        %v814 = vpop.f32.mrb[0].mxu0
        %v815 = vadd.f32 %v746, %v814
        %v816 = vpop.f32.mrb[0].mxu0
        %817 = vdwg.mxu0
        %819 = vrot.lane.b32.xlu0 %v660, 120
        %v820 = vpop.permute.xlu0 %819
        %822 = vrot.lane.b32.xlu0 %v660, 112
        %v823 = vpop.permute.xlu0 %822
        %825 = vrot.lane.b32.xlu0 %v660, 104
        %v826 = vpop.permute.xlu0 %825
        %v828 = vcombine.low %v660, %v823
        %v829 = vcombine.high %v660, %v823
        %v831 = vunpack.c.l.s4 1983009808
        %v832 = vunpack.c.0.s8 %v831
        %v833 = vlaneseq
        %v834 = vshrl.u32 %v833, 7
        %v835 = vsub.s32 %v832, %v834
        %v836 = vrot.slane %v828, %v835
        %v838 = vunpack.c.l.s4 1983009808
        %v839 = vunpack.c.0.s8 %v838
        %v840 = vlaneseq
        %v841 = vshrl.u32 %v840, 7
        %v842 = vsub.s32 %v839, %v841
        %v843 = vrot.slane %v829, %v842
        %v844 = vcombine.low %v820, %v826
        %v845 = vcombine.high %v820, %v826
        %v847 = vunpack.c.l.s4 1983009808
        %v848 = vunpack.c.0.s8 %v847
        %v849 = vlaneseq
        %v850 = vshrl.u32 %v849, 7
        %v851 = vsub.s32 %v848, %v850
        %v852 = vrot.slane %v844, %v851
        %v854 = vunpack.c.l.s4 1983009808
        %v855 = vunpack.c.0.s8 %v854
        %v856 = vlaneseq
        %v857 = vshrl.u32 %v856, 7
        %v858 = vsub.s32 %v855, %v857
        %v859 = vrot.slane %v845, %v858
        %v860 = vcombine.low %v836, %v852
        %v861 = vcombine.high %v836, %v852
        %v863 = vunpack.c.l.s4 1934713408
        %v864 = vunpack.c.0.s8 %v863
        %v865 = vlaneseq
        %v866 = vshrl.u32 %v865, 7
        %v867 = vsub.s32 %v864, %v866
        %v868 = vrot.slane %v860, %v867
        %v870 = vunpack.c.l.s4 1934713408
        %v871 = vunpack.c.0.s8 %v870
        %v872 = vlaneseq
        %v873 = vshrl.u32 %v872, 7
        %v874 = vsub.s32 %v871, %v873
        %v875 = vrot.slane %v861, %v874
        %v876 = vcombine.low %v843, %v859
        %v877 = vcombine.high %v843, %v859
        %v879 = vunpack.c.l.s4 1934713408
        %v880 = vunpack.c.0.s8 %v879
        %v881 = vlaneseq
        %v882 = vshrl.u32 %v881, 7
        %v883 = vsub.s32 %v880, %v882
        %v884 = vrot.slane %v876, %v883
        %v886 = vunpack.c.l.s4 1934713408
        %v887 = vunpack.c.0.s8 %v886
        %v888 = vlaneseq
        %v889 = vshrl.u32 %v888, 7
        %v890 = vsub.s32 %v887, %v889
        %v891 = vrot.slane %v877, %v890
        %v892 = vcombine.high %v868, 0.0
        %v893 = vcombine.high %v875, 0.0
        %v894 = vcombine.high %v884, 0.0
        %v895 = vcombine.high %v891, 0.0
        %v896 = vcombine.low %v868, %v875
        %v898 = vunpack.c.l.s4 1983009808
        %v899 = vunpack.c.0.s8 %v898
        %v900 = vlaneseq
        %v901 = vshrl.u32 %v900, 7
        %v902 = vsub.s32 %v899, %v901
        %v903 = vrot.slane %v896, %v902
        %v904 = vcombine.low %v892, %v893
        %v906 = vunpack.c.l.s4 1983009808
        %v907 = vunpack.c.0.s8 %v906
        %v908 = vlaneseq
        %v909 = vshrl.u32 %v908, 7
        %v910 = vsub.s32 %v907, %v909
        %v911 = vrot.slane %v904, %v910
        %v912 = vcombine.low %v884, %v891
        %v914 = vunpack.c.l.s4 1983009808
        %v915 = vunpack.c.0.s8 %v914
        %v916 = vlaneseq
        %v917 = vshrl.u32 %v916, 7
        %v918 = vsub.s32 %v915, %v917
        %v919 = vrot.slane %v912, %v918
        %v920 = vcombine.low %v894, %v895
        %v922 = vunpack.c.l.s4 1983009808
        %v923 = vunpack.c.0.s8 %v922
        %v924 = vlaneseq
        %v925 = vshrl.u32 %v924, 7
        %v926 = vsub.s32 %v923, %v925
        %v927 = vrot.slane %v920, %v926
        %v928 = vcombine.low %v903, %v911
        %v929 = vcombine.high %v903, %v911
        %v931 = vunpack.c.l.s4 1934713408
        %v932 = vunpack.c.0.s8 %v931
        %v933 = vlaneseq
        %v934 = vshrl.u32 %v933, 7
        %v935 = vsub.s32 %v932, %v934
        %v936 = vrot.slane %v928, %v935
        %v938 = vunpack.c.l.s4 1934713408
        %v939 = vunpack.c.0.s8 %v938
        %v940 = vlaneseq
        %v941 = vshrl.u32 %v940, 7
        %v942 = vsub.s32 %v939, %v941
        %v943 = vrot.slane %v929, %v942
        %v944 = vcombine.low %v919, %v927
        %v945 = vcombine.high %v919, %v927
        %v947 = vunpack.c.l.s4 1934713408
        %v948 = vunpack.c.0.s8 %v947
        %v949 = vlaneseq
        %v950 = vshrl.u32 %v949, 7
        %v951 = vsub.s32 %v948, %v950
        %v952 = vrot.slane %v944, %v951
        %v954 = vunpack.c.l.s4 1934713408
        %v955 = vunpack.c.0.s8 %v954
        %v956 = vlaneseq
        %v957 = vshrl.u32 %v956, 7
        %v958 = vsub.s32 %v955, %v957
        %v959 = vrot.slane %v945, %v958
        %v960 = vcombine.low %v936, %v952
        %v961 = vcombine.high %v936, %v952
        %v962 = vcombine.low %v943, %v959
        %v963 = vcombine.high %v943, %v959
        %965 = vrot.lane.b32.xlu0 %v739, 120
        %v966 = vpop.permute.xlu0 %965
        %968 = vrot.lane.b32.xlu0 %v739, 112
        %v969 = vpop.permute.xlu0 %968
        %971 = vrot.lane.b32.xlu0 %v739, 104
        %v972 = vpop.permute.xlu0 %971
        %v974 = vcombine.low %v739, %v969
        %v975 = vcombine.high %v739, %v969
        %v977 = vunpack.c.l.s4 1983009808
        %v978 = vunpack.c.0.s8 %v977
        %v979 = vlaneseq
        %v980 = vshrl.u32 %v979, 7
        %v981 = vsub.s32 %v978, %v980
        %v982 = vrot.slane %v974, %v981
        %v984 = vunpack.c.l.s4 1983009808
        %v985 = vunpack.c.0.s8 %v984
        %v986 = vlaneseq
        %v987 = vshrl.u32 %v986, 7
        %v988 = vsub.s32 %v985, %v987
        %v989 = vrot.slane %v975, %v988
        %v990 = vcombine.low %v966, %v972
        %v991 = vcombine.high %v966, %v972
        %v993 = vunpack.c.l.s4 1983009808
        %v994 = vunpack.c.0.s8 %v993
        %v995 = vlaneseq
        %v996 = vshrl.u32 %v995, 7
        %v997 = vsub.s32 %v994, %v996
        %v998 = vrot.slane %v990, %v997
        %v1000 = vunpack.c.l.s4 1983009808
        %v1001 = vunpack.c.0.s8 %v1000
        %v1002 = vlaneseq
        %v1003 = vshrl.u32 %v1002, 7
        %v1004 = vsub.s32 %v1001, %v1003
        %v1005 = vrot.slane %v991, %v1004
        %v1006 = vcombine.low %v982, %v998
        %v1007 = vcombine.high %v982, %v998
        %v1009 = vunpack.c.l.s4 1934713408
        %v1010 = vunpack.c.0.s8 %v1009
        %v1011 = vlaneseq
        %v1012 = vshrl.u32 %v1011, 7
        %v1013 = vsub.s32 %v1010, %v1012
        %v1014 = vrot.slane %v1006, %v1013
        %v1016 = vunpack.c.l.s4 1934713408
        %v1017 = vunpack.c.0.s8 %v1016
        %v1018 = vlaneseq
        %v1019 = vshrl.u32 %v1018, 7
        %v1020 = vsub.s32 %v1017, %v1019
        %v1021 = vrot.slane %v1007, %v1020
        %v1022 = vcombine.low %v989, %v1005
        %v1023 = vcombine.high %v989, %v1005
        %v1025 = vunpack.c.l.s4 1934713408
        %v1026 = vunpack.c.0.s8 %v1025
        %v1027 = vlaneseq
        %v1028 = vshrl.u32 %v1027, 7
        %v1029 = vsub.s32 %v1026, %v1028
        %v1030 = vrot.slane %v1022, %v1029
        %v1032 = vunpack.c.l.s4 1934713408
        %v1033 = vunpack.c.0.s8 %v1032
        %v1034 = vlaneseq
        %v1035 = vshrl.u32 %v1034, 7
        %v1036 = vsub.s32 %v1033, %v1035
        %v1037 = vrot.slane %v1023, %v1036
        %v1038 = vcombine.high %v1014, 0.0
        %v1039 = vcombine.high %v1021, 0.0
        %v1040 = vcombine.high %v1030, 0.0
        %v1041 = vcombine.high %v1037, 0.0
        %v1042 = vcombine.low %v1014, %v1021
        %v1044 = vunpack.c.l.s4 1983009808
        %v1045 = vunpack.c.0.s8 %v1044
        %v1046 = vlaneseq
        %v1047 = vshrl.u32 %v1046, 7
        %v1048 = vsub.s32 %v1045, %v1047
        %v1049 = vrot.slane %v1042, %v1048
        %v1050 = vcombine.low %v1038, %v1039
        %v1052 = vunpack.c.l.s4 1983009808
        %v1053 = vunpack.c.0.s8 %v1052
        %v1054 = vlaneseq
        %v1055 = vshrl.u32 %v1054, 7
        %v1056 = vsub.s32 %v1053, %v1055
        %v1057 = vrot.slane %v1050, %v1056
        %v1058 = vcombine.low %v1030, %v1037
        %v1060 = vunpack.c.l.s4 1983009808
        %v1061 = vunpack.c.0.s8 %v1060
        %v1062 = vlaneseq
        %v1063 = vshrl.u32 %v1062, 7
        %v1064 = vsub.s32 %v1061, %v1063
        %v1065 = vrot.slane %v1058, %v1064
        %v1066 = vcombine.low %v1040, %v1041
        %v1068 = vunpack.c.l.s4 1983009808
        %v1069 = vunpack.c.0.s8 %v1068
        %v1070 = vlaneseq
        %v1071 = vshrl.u32 %v1070, 7
        %v1072 = vsub.s32 %v1069, %v1071
        %v1073 = vrot.slane %v1066, %v1072
        %v1074 = vcombine.low %v1049, %v1057
        %v1075 = vcombine.high %v1049, %v1057
        %v1077 = vunpack.c.l.s4 1934713408
        %v1078 = vunpack.c.0.s8 %v1077
        %v1079 = vlaneseq
        %v1080 = vshrl.u32 %v1079, 7
        %v1081 = vsub.s32 %v1078, %v1080
        %v1082 = vrot.slane %v1074, %v1081
        %v1084 = vunpack.c.l.s4 1934713408
        %v1085 = vunpack.c.0.s8 %v1084
        %v1086 = vlaneseq
        %v1087 = vshrl.u32 %v1086, 7
        %v1088 = vsub.s32 %v1085, %v1087
        %v1089 = vrot.slane %v1075, %v1088
        %v1090 = vcombine.low %v1065, %v1073
        %v1091 = vcombine.high %v1065, %v1073
        %v1093 = vunpack.c.l.s4 1934713408
        %v1094 = vunpack.c.0.s8 %v1093
        %v1095 = vlaneseq
        %v1096 = vshrl.u32 %v1095, 7
        %v1097 = vsub.s32 %v1094, %v1096
        %v1098 = vrot.slane %v1090, %v1097
        %v1100 = vunpack.c.l.s4 1934713408
        %v1101 = vunpack.c.0.s8 %v1100
        %v1102 = vlaneseq
        %v1103 = vshrl.u32 %v1102, 7
        %v1104 = vsub.s32 %v1101, %v1103
        %v1105 = vrot.slane %v1091, %v1104
        %v1106 = vcombine.low %v1082, %v1098
        %v1107 = vcombine.high %v1082, %v1098
        %v1108 = vcombine.low %v1089, %v1105
        %v1109 = vcombine.high %v1089, %v1105
        %1111 = vrot.lane.b32.xlu0 %v815, 120
        %v1112 = vpop.permute.xlu0 %1111
        %1114 = vrot.lane.b32.xlu0 %v815, 112
        %v1115 = vpop.permute.xlu0 %1114
        %1117 = vrot.lane.b32.xlu0 %v815, 104
        %v1118 = vpop.permute.xlu0 %1117
        %v1120 = vcombine.low %v815, %v1115
        %v1121 = vcombine.high %v815, %v1115
        %v1123 = vunpack.c.l.s4 1983009808
        %v1124 = vunpack.c.0.s8 %v1123
        %v1125 = vlaneseq
        %v1126 = vshrl.u32 %v1125, 7
        %v1127 = vsub.s32 %v1124, %v1126
        %v1128 = vrot.slane %v1120, %v1127
        %v1130 = vunpack.c.l.s4 1983009808
        %v1131 = vunpack.c.0.s8 %v1130
        %v1132 = vlaneseq
        %v1133 = vshrl.u32 %v1132, 7
        %v1134 = vsub.s32 %v1131, %v1133
        %v1135 = vrot.slane %v1121, %v1134
        %v1136 = vcombine.low %v1112, %v1118
        %v1137 = vcombine.high %v1112, %v1118
        %v1139 = vunpack.c.l.s4 1983009808
        %v1140 = vunpack.c.0.s8 %v1139
        %v1141 = vlaneseq
        %v1142 = vshrl.u32 %v1141, 7
        %v1143 = vsub.s32 %v1140, %v1142
        %v1144 = vrot.slane %v1136, %v1143
        %v1146 = vunpack.c.l.s4 1983009808
        %v1147 = vunpack.c.0.s8 %v1146
        %v1148 = vlaneseq
        %v1149 = vshrl.u32 %v1148, 7
        %v1150 = vsub.s32 %v1147, %v1149
        %v1151 = vrot.slane %v1137, %v1150
        %v1152 = vcombine.low %v1128, %v1144
        %v1153 = vcombine.high %v1128, %v1144
        %v1155 = vunpack.c.l.s4 1934713408
        %v1156 = vunpack.c.0.s8 %v1155
        %v1157 = vlaneseq
        %v1158 = vshrl.u32 %v1157, 7
        %v1159 = vsub.s32 %v1156, %v1158
        %v1160 = vrot.slane %v1152, %v1159
        %v1162 = vunpack.c.l.s4 1934713408
        %v1163 = vunpack.c.0.s8 %v1162
        %v1164 = vlaneseq
        %v1165 = vshrl.u32 %v1164, 7
        %v1166 = vsub.s32 %v1163, %v1165
        %v1167 = vrot.slane %v1153, %v1166
        %v1168 = vcombine.low %v1135, %v1151
        %v1169 = vcombine.high %v1135, %v1151
        %v1171 = vunpack.c.l.s4 1934713408
        %v1172 = vunpack.c.0.s8 %v1171
        %v1173 = vlaneseq
        %v1174 = vshrl.u32 %v1173, 7
        %v1175 = vsub.s32 %v1172, %v1174
        %v1176 = vrot.slane %v1168, %v1175
        %v1178 = vunpack.c.l.s4 1934713408
        %v1179 = vunpack.c.0.s8 %v1178
        %v1180 = vlaneseq
        %v1181 = vshrl.u32 %v1180, 7
        %v1182 = vsub.s32 %v1179, %v1181
        %v1183 = vrot.slane %v1169, %v1182
        %v1184 = vcombine.high %v1160, 0.0
        %v1185 = vcombine.high %v1167, 0.0
        %v1186 = vcombine.high %v1176, 0.0
        %v1187 = vcombine.high %v1183, 0.0
        %v1188 = vcombine.low %v1160, %v1167
        %v1190 = vunpack.c.l.s4 1983009808
        %v1191 = vunpack.c.0.s8 %v1190
        %v1192 = vlaneseq
        %v1193 = vshrl.u32 %v1192, 7
        %v1194 = vsub.s32 %v1191, %v1193
        %v1195 = vrot.slane %v1188, %v1194
        %v1196 = vcombine.low %v1184, %v1185
        %v1198 = vunpack.c.l.s4 1983009808
        %v1199 = vunpack.c.0.s8 %v1198
        %v1200 = vlaneseq
        %v1201 = vshrl.u32 %v1200, 7
        %v1202 = vsub.s32 %v1199, %v1201
        %v1203 = vrot.slane %v1196, %v1202
        %v1204 = vcombine.low %v1176, %v1183
        %v1206 = vunpack.c.l.s4 1983009808
        %v1207 = vunpack.c.0.s8 %v1206
        %v1208 = vlaneseq
        %v1209 = vshrl.u32 %v1208, 7
        %v1210 = vsub.s32 %v1207, %v1209
        %v1211 = vrot.slane %v1204, %v1210
        %v1212 = vcombine.low %v1186, %v1187
        %v1214 = vunpack.c.l.s4 1983009808
        %v1215 = vunpack.c.0.s8 %v1214
        %v1216 = vlaneseq
        %v1217 = vshrl.u32 %v1216, 7
        %v1218 = vsub.s32 %v1215, %v1217
        %v1219 = vrot.slane %v1212, %v1218
        %v1220 = vcombine.low %v1195, %v1203
        %v1221 = vcombine.high %v1195, %v1203
        %v1223 = vunpack.c.l.s4 1934713408
        %v1224 = vunpack.c.0.s8 %v1223
        %v1225 = vlaneseq
        %v1226 = vshrl.u32 %v1225, 7
        %v1227 = vsub.s32 %v1224, %v1226
        %v1228 = vrot.slane %v1220, %v1227
        %v1230 = vunpack.c.l.s4 1934713408
        %v1231 = vunpack.c.0.s8 %v1230
        %v1232 = vlaneseq
        %v1233 = vshrl.u32 %v1232, 7
        %v1234 = vsub.s32 %v1231, %v1233
        %v1235 = vrot.slane %v1221, %v1234
        %v1236 = vcombine.low %v1211, %v1219
        %v1237 = vcombine.high %v1211, %v1219
        %v1239 = vunpack.c.l.s4 1934713408
        %v1240 = vunpack.c.0.s8 %v1239
        %v1241 = vlaneseq
        %v1242 = vshrl.u32 %v1241, 7
        %v1243 = vsub.s32 %v1240, %v1242
        %v1244 = vrot.slane %v1236, %v1243
        %v1246 = vunpack.c.l.s4 1934713408
        %v1247 = vunpack.c.0.s8 %v1246
        %v1248 = vlaneseq
        %v1249 = vshrl.u32 %v1248, 7
        %v1250 = vsub.s32 %v1247, %v1249
        %v1251 = vrot.slane %v1237, %v1250
        %v1252 = vcombine.low %v1228, %v1244
        %v1253 = vcombine.high %v1228, %v1244
        %v1254 = vcombine.low %v1235, %v1251
        %v1255 = vcombine.high %v1235, %v1251
        %vm1256 = vcmask 64512
        %v1258 = vsel %vm1256, %v960, 0
        %v1261 = vsel %vm1256, %v1106, 0
        %1263 = vmatprep.subr.mxu0 0.0
        %1264 = vmatpush1.xpose.msra.mxu0 %v1261
        %1265 = vmatprep.subr.mxu0 0.0
        %1266 = vmatpush1.xpose.msra.mxu0 0.0
        %1267 = vmatprep.subr.mxu0 0.0
        %1268 = vmatpush1.xpose.msra.mxu0 0.0
        %1269 = vmatprep.subr.mxu0 0.0
        %1270 = vmatpush1.xpose.msra.mxu0 0.0
        %1271 = vmatprep.subr.mxu0 0.0
        %1272 = vmatpush1.xpose.msra.mxu0 0.0
        %1273 = vmatprep.subr.mxu0 0.0
        %1274 = vmatpush1.xpose.msra.mxu0 0.0
        %1275 = vmatprep.subr.mxu0 0.0
        %1276 = vmatpush1.xpose.msra.mxu0 0.0
        %1277 = vmatprep.subr.mxu0 0.0
        %1278 = vmatpush1.xpose.msra.mxu0 0.0
        %1279 = vmatprep.subr.mxu0 0.0
        %1280 = vmatpush1.xpose.msra.mxu0 0.0
        %1281 = vmatprep.subr.mxu0 0.0
        %1282 = vmatpush1.xpose.msra.mxu0 0.0
        %1283 = vmatprep.subr.mxu0 0.0
        %1284 = vmatpush1.xpose.msra.mxu0 0.0
        %1285 = vmatprep.subr.mxu0 0.0
        %1286 = vmatpush1.xpose.msra.mxu0 0.0
        %1287 = vmatprep.subr.mxu0 0.0
        %1288 = vmatpush1.xpose.msra.mxu0 0.0
        %1289 = vmatprep.subr.mxu0 0.0
        %1290 = vmatpush1.xpose.msra.mxu0 0.0
        %1291 = vmatprep.subr.mxu0 0.0
        %1292 = vmatpush1.xpose.msra.mxu0 0.0
        %1293 = vmatprep.subr.mxu0 0.0
        %1294 = vmatpush1.xpose.msra.mxu0 0.0
        %1295 = vmatprep.subr.mxu0 0.0
        %1296 = vmatpush1.xpose.msra.mxu0 0.0
        %1297 = vmatprep.subr.mxu0 0.0
        %1298 = vmatpush1.xpose.msra.mxu0 0.0
        %1299 = vmatprep.subr.mxu0 0.0
        %1300 = vmatpush1.xpose.msra.mxu0 0.0
        %1301 = vmatprep.subr.mxu0 0.0
        %1302 = vmatpush1.xpose.msra.mxu0 0.0
        %1303 = vmatprep.subr.mxu0 0.0
        %1304 = vmatpush1.xpose.msra.mxu0 0.0
        %1305 = vmatprep.subr.mxu0 0.0
        %1306 = vmatpush1.xpose.msra.mxu0 0.0
        %1307 = vmatprep.subr.mxu0 0.0
        %1308 = vmatpush1.xpose.msra.mxu0 0.0
        %1309 = vmatprep.subr.mxu0 0.0
        %1310 = vmatpush1.xpose.msra.mxu0 0.0
        %1311 = vmatprep.subr.mxu0 0.0
        %1312 = vmatpush1.xpose.msra.mxu0 0.0
        %1313 = vmatprep.subr.mxu0 0.0
        %1314 = vmatpush1.xpose.msra.mxu0 0.0
        %1315 = vmatprep.subr.mxu0 0.0
        %1316 = vmatpush1.xpose.msra.mxu0 0.0
        %1317 = vmatprep.subr.mxu0 0.0
        %1318 = vmatpush1.xpose.msra.mxu0 0.0
        %1319 = vmatprep.subr.mxu0 0.0
        %1320 = vmatpush1.xpose.msra.mxu0 0.0
        %1321 = vmatprep.subr.mxu0 0.0
        %1322 = vmatpush1.xpose.msra.mxu0 0.0
        %1323 = vmatprep.subr.mxu0 0.0
        %1324 = vmatpush1.xpose.msra.mxu0 0.0
        %1325 = vmatprep.subr.mxu0 0.0
        %1326 = vmatpush1.xpose.msra.mxu0 0.0
        %1327 = vmatprep.mubr.f32.mxu0 0.0
        %1328 = vmatmul.mubr.f32.gmra.mrb[0].mxu0 %v1258
        %v1329 = vpop.f32.mrb[0].mxu0
        %v1330 = vadd.f32 0.0, %v1329
        %v1331 = vpop.f32.mrb[0].mxu0
        %1332 = vdwg.mxu0
        %v1334 = vsel %vm1256, %v961, 0
        %v1337 = vsel %vm1256, %v1107, 0
        %1339 = vmatprep.subr.mxu0 0.0
        %1340 = vmatpush1.xpose.msra.mxu0 %v1337
        %1341 = vmatprep.subr.mxu0 0.0
        %1342 = vmatpush1.xpose.msra.mxu0 0.0
        %1343 = vmatprep.subr.mxu0 0.0
        %1344 = vmatpush1.xpose.msra.mxu0 0.0
        %1345 = vmatprep.subr.mxu0 0.0
        %1346 = vmatpush1.xpose.msra.mxu0 0.0
        %1347 = vmatprep.subr.mxu0 0.0
        %1348 = vmatpush1.xpose.msra.mxu0 0.0
        %1349 = vmatprep.subr.mxu0 0.0
        %1350 = vmatpush1.xpose.msra.mxu0 0.0
        %1351 = vmatprep.subr.mxu0 0.0
        %1352 = vmatpush1.xpose.msra.mxu0 0.0
        %1353 = vmatprep.subr.mxu0 0.0
        %1354 = vmatpush1.xpose.msra.mxu0 0.0
        %1355 = vmatprep.subr.mxu0 0.0
        %1356 = vmatpush1.xpose.msra.mxu0 0.0
        %1357 = vmatprep.subr.mxu0 0.0
        %1358 = vmatpush1.xpose.msra.mxu0 0.0
        %1359 = vmatprep.subr.mxu0 0.0
        %1360 = vmatpush1.xpose.msra.mxu0 0.0
        %1361 = vmatprep.subr.mxu0 0.0
        %1362 = vmatpush1.xpose.msra.mxu0 0.0
        %1363 = vmatprep.subr.mxu0 0.0
        %1364 = vmatpush1.xpose.msra.mxu0 0.0
        %1365 = vmatprep.subr.mxu0 0.0
        %1366 = vmatpush1.xpose.msra.mxu0 0.0
        %1367 = vmatprep.subr.mxu0 0.0
        %1368 = vmatpush1.xpose.msra.mxu0 0.0
        %1369 = vmatprep.subr.mxu0 0.0
        %1370 = vmatpush1.xpose.msra.mxu0 0.0
        %1371 = vmatprep.subr.mxu0 0.0
        %1372 = vmatpush1.xpose.msra.mxu0 0.0
        %1373 = vmatprep.subr.mxu0 0.0
        %1374 = vmatpush1.xpose.msra.mxu0 0.0
        %1375 = vmatprep.subr.mxu0 0.0
        %1376 = vmatpush1.xpose.msra.mxu0 0.0
        %1377 = vmatprep.subr.mxu0 0.0
        %1378 = vmatpush1.xpose.msra.mxu0 0.0
        %1379 = vmatprep.subr.mxu0 0.0
        %1380 = vmatpush1.xpose.msra.mxu0 0.0
        %1381 = vmatprep.subr.mxu0 0.0
        %1382 = vmatpush1.xpose.msra.mxu0 0.0
        %1383 = vmatprep.subr.mxu0 0.0
        %1384 = vmatpush1.xpose.msra.mxu0 0.0
        %1385 = vmatprep.subr.mxu0 0.0
        %1386 = vmatpush1.xpose.msra.mxu0 0.0
        %1387 = vmatprep.subr.mxu0 0.0
        %1388 = vmatpush1.xpose.msra.mxu0 0.0
        %1389 = vmatprep.subr.mxu0 0.0
        %1390 = vmatpush1.xpose.msra.mxu0 0.0
        %1391 = vmatprep.subr.mxu0 0.0
        %1392 = vmatpush1.xpose.msra.mxu0 0.0
        %1393 = vmatprep.subr.mxu0 0.0
        %1394 = vmatpush1.xpose.msra.mxu0 0.0
        %1395 = vmatprep.subr.mxu0 0.0
        %1396 = vmatpush1.xpose.msra.mxu0 0.0
        %1397 = vmatprep.subr.mxu0 0.0
        %1398 = vmatpush1.xpose.msra.mxu0 0.0
        %1399 = vmatprep.subr.mxu0 0.0
        %1400 = vmatpush1.xpose.msra.mxu0 0.0
        %1401 = vmatprep.subr.mxu0 0.0
        %1402 = vmatpush1.xpose.msra.mxu0 0.0
        %1403 = vmatprep.mubr.f32.mxu0 0.0
        %1404 = vmatmul.mubr.f32.gmra.mrb[0].mxu0 %v1334
        %v1405 = vpop.f32.mrb[0].mxu0
        %v1406 = vadd.f32 0.0, %v1405
        %v1407 = vpop.f32.mrb[0].mxu0
        %1408 = vdwg.mxu0
        %v1410 = vsel %vm1256, %v962, 0
        %v1413 = vsel %vm1256, %v1108, 0
        %1415 = vmatprep.subr.mxu0 0.0
        %1416 = vmatpush1.xpose.msra.mxu0 %v1413
        %1417 = vmatprep.subr.mxu0 0.0
        %1418 = vmatpush1.xpose.msra.mxu0 0.0
        %1419 = vmatprep.subr.mxu0 0.0
        %1420 = vmatpush1.xpose.msra.mxu0 0.0
        %1421 = vmatprep.subr.mxu0 0.0
        %1422 = vmatpush1.xpose.msra.mxu0 0.0
        %1423 = vmatprep.subr.mxu0 0.0
        %1424 = vmatpush1.xpose.msra.mxu0 0.0
        %1425 = vmatprep.subr.mxu0 0.0
        %1426 = vmatpush1.xpose.msra.mxu0 0.0
        %1427 = vmatprep.subr.mxu0 0.0
        %1428 = vmatpush1.xpose.msra.mxu0 0.0
        %1429 = vmatprep.subr.mxu0 0.0
        %1430 = vmatpush1.xpose.msra.mxu0 0.0
        %1431 = vmatprep.subr.mxu0 0.0
        %1432 = vmatpush1.xpose.msra.mxu0 0.0
        %1433 = vmatprep.subr.mxu0 0.0
        %1434 = vmatpush1.xpose.msra.mxu0 0.0
        %1435 = vmatprep.subr.mxu0 0.0
        %1436 = vmatpush1.xpose.msra.mxu0 0.0
        %1437 = vmatprep.subr.mxu0 0.0
        %1438 = vmatpush1.xpose.msra.mxu0 0.0
        %1439 = vmatprep.subr.mxu0 0.0
        %1440 = vmatpush1.xpose.msra.mxu0 0.0
        %1441 = vmatprep.subr.mxu0 0.0
        %1442 = vmatpush1.xpose.msra.mxu0 0.0
        %1443 = vmatprep.subr.mxu0 0.0
        %1444 = vmatpush1.xpose.msra.mxu0 0.0
        %1445 = vmatprep.subr.mxu0 0.0
        %1446 = vmatpush1.xpose.msra.mxu0 0.0
        %1447 = vmatprep.subr.mxu0 0.0
        %1448 = vmatpush1.xpose.msra.mxu0 0.0
        %1449 = vmatprep.subr.mxu0 0.0
        %1450 = vmatpush1.xpose.msra.mxu0 0.0
        %1451 = vmatprep.subr.mxu0 0.0
        %1452 = vmatpush1.xpose.msra.mxu0 0.0
        %1453 = vmatprep.subr.mxu0 0.0
        %1454 = vmatpush1.xpose.msra.mxu0 0.0
        %1455 = vmatprep.subr.mxu0 0.0
        %1456 = vmatpush1.xpose.msra.mxu0 0.0
        %1457 = vmatprep.subr.mxu0 0.0
        %1458 = vmatpush1.xpose.msra.mxu0 0.0
        %1459 = vmatprep.subr.mxu0 0.0
        %1460 = vmatpush1.xpose.msra.mxu0 0.0
        %1461 = vmatprep.subr.mxu0 0.0
        %1462 = vmatpush1.xpose.msra.mxu0 0.0
        %1463 = vmatprep.subr.mxu0 0.0
        %1464 = vmatpush1.xpose.msra.mxu0 0.0
        %1465 = vmatprep.subr.mxu0 0.0
        %1466 = vmatpush1.xpose.msra.mxu0 0.0
        %1467 = vmatprep.subr.mxu0 0.0
        %1468 = vmatpush1.xpose.msra.mxu0 0.0
        %1469 = vmatprep.subr.mxu0 0.0
        %1470 = vmatpush1.xpose.msra.mxu0 0.0
        %1471 = vmatprep.subr.mxu0 0.0
        %1472 = vmatpush1.xpose.msra.mxu0 0.0
        %1473 = vmatprep.subr.mxu0 0.0
        %1474 = vmatpush1.xpose.msra.mxu0 0.0
        %1475 = vmatprep.subr.mxu0 0.0
        %1476 = vmatpush1.xpose.msra.mxu0 0.0
        %1477 = vmatprep.subr.mxu0 0.0
        %1478 = vmatpush1.xpose.msra.mxu0 0.0
        %1479 = vmatprep.mubr.f32.mxu0 0.0
        %1480 = vmatmul.mubr.f32.gmra.mrb[0].mxu0 %v1410
        %v1481 = vpop.f32.mrb[0].mxu0
        %v1482 = vadd.f32 0.0, %v1481
        %v1483 = vpop.f32.mrb[0].mxu0
        %1484 = vdwg.mxu0
        %v1486 = vsel %vm1256, %v963, 0
        %v1489 = vsel %vm1256, %v1109, 0
        %1491 = vmatprep.subr.mxu0 0.0
        %1492 = vmatpush1.xpose.msra.mxu0 %v1489
        %1493 = vmatprep.subr.mxu0 0.0
        %1494 = vmatpush1.xpose.msra.mxu0 0.0
        %1495 = vmatprep.subr.mxu0 0.0
        %1496 = vmatpush1.xpose.msra.mxu0 0.0
        %1497 = vmatprep.subr.mxu0 0.0
        %1498 = vmatpush1.xpose.msra.mxu0 0.0
        %1499 = vmatprep.subr.mxu0 0.0
        %1500 = vmatpush1.xpose.msra.mxu0 0.0
        %1501 = vmatprep.subr.mxu0 0.0
        %1502 = vmatpush1.xpose.msra.mxu0 0.0
        %1503 = vmatprep.subr.mxu0 0.0
        %1504 = vmatpush1.xpose.msra.mxu0 0.0
        %1505 = vmatprep.subr.mxu0 0.0
        %1506 = vmatpush1.xpose.msra.mxu0 0.0
        %1507 = vmatprep.subr.mxu0 0.0
        %1508 = vmatpush1.xpose.msra.mxu0 0.0
        %1509 = vmatprep.subr.mxu0 0.0
        %1510 = vmatpush1.xpose.msra.mxu0 0.0
        %1511 = vmatprep.subr.mxu0 0.0
        %1512 = vmatpush1.xpose.msra.mxu0 0.0
        %1513 = vmatprep.subr.mxu0 0.0
        %1514 = vmatpush1.xpose.msra.mxu0 0.0
        %1515 = vmatprep.subr.mxu0 0.0
        %1516 = vmatpush1.xpose.msra.mxu0 0.0
        %1517 = vmatprep.subr.mxu0 0.0
        %1518 = vmatpush1.xpose.msra.mxu0 0.0
        %1519 = vmatprep.subr.mxu0 0.0
        %1520 = vmatpush1.xpose.msra.mxu0 0.0
        %1521 = vmatprep.subr.mxu0 0.0
        %1522 = vmatpush1.xpose.msra.mxu0 0.0
        %1523 = vmatprep.subr.mxu0 0.0
        %1524 = vmatpush1.xpose.msra.mxu0 0.0
        %1525 = vmatprep.subr.mxu0 0.0
        %1526 = vmatpush1.xpose.msra.mxu0 0.0
        %1527 = vmatprep.subr.mxu0 0.0
        %1528 = vmatpush1.xpose.msra.mxu0 0.0
        %1529 = vmatprep.subr.mxu0 0.0
        %1530 = vmatpush1.xpose.msra.mxu0 0.0
        %1531 = vmatprep.subr.mxu0 0.0
        %1532 = vmatpush1.xpose.msra.mxu0 0.0
        %1533 = vmatprep.subr.mxu0 0.0
        %1534 = vmatpush1.xpose.msra.mxu0 0.0
        %1535 = vmatprep.subr.mxu0 0.0
        %1536 = vmatpush1.xpose.msra.mxu0 0.0
        %1537 = vmatprep.subr.mxu0 0.0
        %1538 = vmatpush1.xpose.msra.mxu0 0.0
        %1539 = vmatprep.subr.mxu0 0.0
        %1540 = vmatpush1.xpose.msra.mxu0 0.0
        %1541 = vmatprep.subr.mxu0 0.0
        %1542 = vmatpush1.xpose.msra.mxu0 0.0
        %1543 = vmatprep.subr.mxu0 0.0
        %1544 = vmatpush1.xpose.msra.mxu0 0.0
        %1545 = vmatprep.subr.mxu0 0.0
        %1546 = vmatpush1.xpose.msra.mxu0 0.0
        %1547 = vmatprep.subr.mxu0 0.0
        %1548 = vmatpush1.xpose.msra.mxu0 0.0
        %1549 = vmatprep.subr.mxu0 0.0
        %1550 = vmatpush1.xpose.msra.mxu0 0.0
        %1551 = vmatprep.subr.mxu0 0.0
        %1552 = vmatpush1.xpose.msra.mxu0 0.0
        %1553 = vmatprep.subr.mxu0 0.0
        %1554 = vmatpush1.xpose.msra.mxu0 0.0
        %1555 = vmatprep.mubr.f32.mxu0 0.0
        %1556 = vmatmul.mubr.f32.gmra.mrb[0].mxu0 %v1486
        %v1557 = vpop.f32.mrb[0].mxu0
        %v1558 = vadd.f32 0.0, %v1557
        %v1559 = vpop.f32.mrb[0].mxu0
        %1560 = vdwg.mxu0
        %v1561 = vsel %vm1256, %v1330, -inf
        %1562 = vmax.xlane.f32.xlu0 %v1561
        %v1563 = vpop.xlane.xlu0 %1562
        %v1564 = vsel %vm1256, %v1406, -inf
        %1565 = vmax.xlane.f32.xlu0 %v1564
        %v1566 = vpop.xlane.xlu0 %1565
        %v1567 = vsel %vm1256, %v1482, -inf
        %1568 = vmax.xlane.f32.xlu0 %v1567
        %v1569 = vpop.xlane.xlu0 %1568
        %v1570 = vsel %vm1256, %v1558, -inf
        %1571 = vmax.xlane.f32.xlu0 %v1570
        %v1572 = vpop.xlane.xlu0 %1571
        %v1573 = vsub.f32 %v1330, %v1563
        %v1574 = vsub.f32 %v1406, %v1566
        %v1575 = vsub.f32 %v1482, %v1569
        %v1576 = vsub.f32 %v1558, %v1572
        %v1577 = vmul.f32 %v1573, 1.442695
        %v1578 = vpow.pop %v1577
        %v1579 = vmul.f32 %v1574, 1.442695
        %v1580 = vpow.pop %v1579
        %v1581 = vmul.f32 %v1575, 1.442695
        %v1582 = vpow.pop %v1581
        %v1583 = vmul.f32 %v1576, 1.442695
        %v1584 = vpow.pop %v1583
        %v1585 = vsel %vm1256, %v1578, 0.0
        %1586 = vadd.xlane.f32.xlu0 %v1585
        %v1587 = vpop.xlane.xlu0 %1586
        %v1588 = vsel %vm1256, %v1580, 0.0
        %1589 = vadd.xlane.f32.xlu0 %v1588
        %v1590 = vpop.xlane.xlu0 %1589
        %v1591 = vsel %vm1256, %v1582, 0.0
        %1592 = vadd.xlane.f32.xlu0 %v1591
        %v1593 = vpop.xlane.xlu0 %1592
        %v1594 = vsel %vm1256, %v1584, 0.0
        %1595 = vadd.xlane.f32.xlu0 %v1594
        %v1596 = vpop.xlane.xlu0 %1595
        %v1597 = vrcp.pop %v1587
        %v1598 = vrcp.pop %v1590
        %v1599 = vrcp.pop %v1593
        %v1600 = vrcp.pop %v1596
        %v1601 = vmul.f32 %v1578, %v1597
        %v1602 = vmul.f32 %v1580, %v1598
        %v1603 = vmul.f32 %v1582, %v1599
        %v1604 = vmul.f32 %v1584, %v1600
        %v1606 = vsel %vm1256, %v1601, 0
        %1608 = vmatprep.subr.mxu0 0.0
        %1609 = vmatpush1.msra.mxu0 %v1252
        %1610 = vmatprep.subr.mxu0 0.0
        %1611 = vmatpush1.msra.mxu0 0.0
        %1612 = vmatprep.subr.mxu0 0.0
        %1613 = vmatpush1.msra.mxu0 0.0
        %1614 = vmatprep.subr.mxu0 0.0
        %1615 = vmatpush1.msra.mxu0 0.0
        %1616 = vmatprep.subr.mxu0 0.0
        %1617 = vmatpush1.msra.mxu0 0.0
        %1618 = vmatprep.subr.mxu0 0.0
        %1619 = vmatpush1.msra.mxu0 0.0
        %1620 = vmatprep.subr.mxu0 0.0
        %1621 = vmatpush1.msra.mxu0 0.0
        %1622 = vmatprep.subr.mxu0 0.0
        %1623 = vmatpush1.msra.mxu0 0.0
        %1624 = vmatprep.subr.mxu0 0.0
        %1625 = vmatpush1.msra.mxu0 0.0
        %1626 = vmatprep.subr.mxu0 0.0
        %1627 = vmatpush1.msra.mxu0 0.0
        %1628 = vmatprep.subr.mxu0 0.0
        %1629 = vmatpush1.msra.mxu0 0.0
        %1630 = vmatprep.subr.mxu0 0.0
        %1631 = vmatpush1.msra.mxu0 0.0
        %1632 = vmatprep.subr.mxu0 0.0
        %1633 = vmatpush1.msra.mxu0 0.0
        %1634 = vmatprep.subr.mxu0 0.0
        %1635 = vmatpush1.msra.mxu0 0.0
        %1636 = vmatprep.subr.mxu0 0.0
        %1637 = vmatpush1.msra.mxu0 0.0
        %1638 = vmatprep.subr.mxu0 0.0
        %1639 = vmatpush1.msra.mxu0 0.0
        %1640 = vmatprep.subr.mxu0 0.0
        %1641 = vmatpush1.msra.mxu0 0.0
        %1642 = vmatprep.subr.mxu0 0.0
        %1643 = vmatpush1.msra.mxu0 0.0
        %1644 = vmatprep.subr.mxu0 0.0
        %1645 = vmatpush1.msra.mxu0 0.0
        %1646 = vmatprep.subr.mxu0 0.0
        %1647 = vmatpush1.msra.mxu0 0.0
        %1648 = vmatprep.subr.mxu0 0.0
        %1649 = vmatpush1.msra.mxu0 0.0
        %1650 = vmatprep.subr.mxu0 0.0
        %1651 = vmatpush1.msra.mxu0 0.0
        %1652 = vmatprep.subr.mxu0 0.0
        %1653 = vmatpush1.msra.mxu0 0.0
        %1654 = vmatprep.subr.mxu0 0.0
        %1655 = vmatpush1.msra.mxu0 0.0
        %1656 = vmatprep.subr.mxu0 0.0
        %1657 = vmatpush1.msra.mxu0 0.0
        %1658 = vmatprep.subr.mxu0 0.0
        %1659 = vmatpush1.msra.mxu0 0.0
        %1660 = vmatprep.subr.mxu0 0.0
        %1661 = vmatpush1.msra.mxu0 0.0
        %1662 = vmatprep.subr.mxu0 0.0
        %1663 = vmatpush1.msra.mxu0 0.0
        %1664 = vmatprep.subr.mxu0 0.0
        %1665 = vmatpush1.msra.mxu0 0.0
        %1666 = vmatprep.subr.mxu0 0.0
        %1667 = vmatpush1.msra.mxu0 0.0
        %1668 = vmatprep.subr.mxu0 0.0
        %1669 = vmatpush1.msra.mxu0 0.0
        %1670 = vmatprep.subr.mxu0 0.0
        %1671 = vmatpush1.msra.mxu0 0.0
        %1672 = vmatprep.mubr.f32.mxu0 0.0
        %1673 = vmatmul.mubr.f32.gmra.mrb[0].mxu0 %v1606
        %v1674 = vpop.f32.mrb[0].mxu0
        %v1675 = vadd.f32 0.0, %v1674
        %v1676 = vpop.f32.mrb[0].mxu0
        %1677 = vdwg.mxu0
        %v1679 = vsel %vm1256, %v1602, 0
        %1681 = vmatprep.subr.mxu0 0.0
        %1682 = vmatpush1.msra.mxu0 %v1253
        %1683 = vmatprep.subr.mxu0 0.0
        %1684 = vmatpush1.msra.mxu0 0.0
        %1685 = vmatprep.subr.mxu0 0.0
        %1686 = vmatpush1.msra.mxu0 0.0
        %1687 = vmatprep.subr.mxu0 0.0
        %1688 = vmatpush1.msra.mxu0 0.0
        %1689 = vmatprep.subr.mxu0 0.0
        %1690 = vmatpush1.msra.mxu0 0.0
        %1691 = vmatprep.subr.mxu0 0.0
        %1692 = vmatpush1.msra.mxu0 0.0
        %1693 = vmatprep.subr.mxu0 0.0
        %1694 = vmatpush1.msra.mxu0 0.0
        %1695 = vmatprep.subr.mxu0 0.0
        %1696 = vmatpush1.msra.mxu0 0.0
        %1697 = vmatprep.subr.mxu0 0.0
        %1698 = vmatpush1.msra.mxu0 0.0
        %1699 = vmatprep.subr.mxu0 0.0
        %1700 = vmatpush1.msra.mxu0 0.0
        %1701 = vmatprep.subr.mxu0 0.0
        %1702 = vmatpush1.msra.mxu0 0.0
        %1703 = vmatprep.subr.mxu0 0.0
        %1704 = vmatpush1.msra.mxu0 0.0
        %1705 = vmatprep.subr.mxu0 0.0
        %1706 = vmatpush1.msra.mxu0 0.0
        %1707 = vmatprep.subr.mxu0 0.0
        %1708 = vmatpush1.msra.mxu0 0.0
        %1709 = vmatprep.subr.mxu0 0.0
        %1710 = vmatpush1.msra.mxu0 0.0
        %1711 = vmatprep.subr.mxu0 0.0
        %1712 = vmatpush1.msra.mxu0 0.0
        %1713 = vmatprep.subr.mxu0 0.0
        %1714 = vmatpush1.msra.mxu0 0.0
        %1715 = vmatprep.subr.mxu0 0.0
        %1716 = vmatpush1.msra.mxu0 0.0
        %1717 = vmatprep.subr.mxu0 0.0
        %1718 = vmatpush1.msra.mxu0 0.0
        %1719 = vmatprep.subr.mxu0 0.0
        %1720 = vmatpush1.msra.mxu0 0.0
        %1721 = vmatprep.subr.mxu0 0.0
        %1722 = vmatpush1.msra.mxu0 0.0
        %1723 = vmatprep.subr.mxu0 0.0
        %1724 = vmatpush1.msra.mxu0 0.0
        %1725 = vmatprep.subr.mxu0 0.0
        %1726 = vmatpush1.msra.mxu0 0.0
        %1727 = vmatprep.subr.mxu0 0.0
        %1728 = vmatpush1.msra.mxu0 0.0
        %1729 = vmatprep.subr.mxu0 0.0
        %1730 = vmatpush1.msra.mxu0 0.0
        %1731 = vmatprep.subr.mxu0 0.0
        %1732 = vmatpush1.msra.mxu0 0.0
        %1733 = vmatprep.subr.mxu0 0.0
        %1734 = vmatpush1.msra.mxu0 0.0
        %1735 = vmatprep.subr.mxu0 0.0
        %1736 = vmatpush1.msra.mxu0 0.0
        %1737 = vmatprep.subr.mxu0 0.0
        %1738 = vmatpush1.msra.mxu0 0.0
        %1739 = vmatprep.subr.mxu0 0.0
        %1740 = vmatpush1.msra.mxu0 0.0
        %1741 = vmatprep.subr.mxu0 0.0
        %1742 = vmatpush1.msra.mxu0 0.0
        %1743 = vmatprep.subr.mxu0 0.0
        %1744 = vmatpush1.msra.mxu0 0.0
        %1745 = vmatprep.mubr.f32.mxu0 0.0
        %1746 = vmatmul.mubr.f32.gmra.mrb[0].mxu0 %v1679
        %v1747 = vpop.f32.mrb[0].mxu0
        %v1748 = vadd.f32 0.0, %v1747
        %v1749 = vpop.f32.mrb[0].mxu0
        %1750 = vdwg.mxu0
        %v1752 = vsel %vm1256, %v1603, 0
        %1754 = vmatprep.subr.mxu0 0.0
        %1755 = vmatpush1.msra.mxu0 %v1254
        %1756 = vmatprep.subr.mxu0 0.0
        %1757 = vmatpush1.msra.mxu0 0.0
        %1758 = vmatprep.subr.mxu0 0.0
        %1759 = vmatpush1.msra.mxu0 0.0
        %1760 = vmatprep.subr.mxu0 0.0
        %1761 = vmatpush1.msra.mxu0 0.0
        %1762 = vmatprep.subr.mxu0 0.0
        %1763 = vmatpush1.msra.mxu0 0.0
        %1764 = vmatprep.subr.mxu0 0.0
        %1765 = vmatpush1.msra.mxu0 0.0
        %1766 = vmatprep.subr.mxu0 0.0
        %1767 = vmatpush1.msra.mxu0 0.0
        %1768 = vmatprep.subr.mxu0 0.0
        %1769 = vmatpush1.msra.mxu0 0.0
        %1770 = vmatprep.subr.mxu0 0.0
        %1771 = vmatpush1.msra.mxu0 0.0
        %1772 = vmatprep.subr.mxu0 0.0
        %1773 = vmatpush1.msra.mxu0 0.0
        %1774 = vmatprep.subr.mxu0 0.0
        %1775 = vmatpush1.msra.mxu0 0.0
        %1776 = vmatprep.subr.mxu0 0.0
        %1777 = vmatpush1.msra.mxu0 0.0
        %1778 = vmatprep.subr.mxu0 0.0
        %1779 = vmatpush1.msra.mxu0 0.0
        %1780 = vmatprep.subr.mxu0 0.0
        %1781 = vmatpush1.msra.mxu0 0.0
        %1782 = vmatprep.subr.mxu0 0.0
        %1783 = vmatpush1.msra.mxu0 0.0
        %1784 = vmatprep.subr.mxu0 0.0
        %1785 = vmatpush1.msra.mxu0 0.0
        %1786 = vmatprep.subr.mxu0 0.0
        %1787 = vmatpush1.msra.mxu0 0.0
        %1788 = vmatprep.subr.mxu0 0.0
        %1789 = vmatpush1.msra.mxu0 0.0
        %1790 = vmatprep.subr.mxu0 0.0
        %1791 = vmatpush1.msra.mxu0 0.0
        %1792 = vmatprep.subr.mxu0 0.0
        %1793 = vmatpush1.msra.mxu0 0.0
        %1794 = vmatprep.subr.mxu0 0.0
        %1795 = vmatpush1.msra.mxu0 0.0
        %1796 = vmatprep.subr.mxu0 0.0
        %1797 = vmatpush1.msra.mxu0 0.0
        %1798 = vmatprep.subr.mxu0 0.0
        %1799 = vmatpush1.msra.mxu0 0.0
        %1800 = vmatprep.subr.mxu0 0.0
        %1801 = vmatpush1.msra.mxu0 0.0
        %1802 = vmatprep.subr.mxu0 0.0
        %1803 = vmatpush1.msra.mxu0 0.0
        %1804 = vmatprep.subr.mxu0 0.0
        %1805 = vmatpush1.msra.mxu0 0.0
        %1806 = vmatprep.subr.mxu0 0.0
        %1807 = vmatpush1.msra.mxu0 0.0
        %1808 = vmatprep.subr.mxu0 0.0
        %1809 = vmatpush1.msra.mxu0 0.0
        %1810 = vmatprep.subr.mxu0 0.0
        %1811 = vmatpush1.msra.mxu0 0.0
        %1812 = vmatprep.subr.mxu0 0.0
        %1813 = vmatpush1.msra.mxu0 0.0
        %1814 = vmatprep.subr.mxu0 0.0
        %1815 = vmatpush1.msra.mxu0 0.0
        %1816 = vmatprep.subr.mxu0 0.0
        %1817 = vmatpush1.msra.mxu0 0.0
        %1818 = vmatprep.mubr.f32.mxu0 0.0
        %1819 = vmatmul.mubr.f32.gmra.mrb[0].mxu0 %v1752
        %v1820 = vpop.f32.mrb[0].mxu0
        %v1821 = vadd.f32 0.0, %v1820
        %v1822 = vpop.f32.mrb[0].mxu0
        %1823 = vdwg.mxu0
        %v1825 = vsel %vm1256, %v1604, 0
        %1827 = vmatprep.subr.mxu0 0.0
        %1828 = vmatpush1.msra.mxu0 %v1255
        %1829 = vmatprep.subr.mxu0 0.0
        %1830 = vmatpush1.msra.mxu0 0.0
        %1831 = vmatprep.subr.mxu0 0.0
        %1832 = vmatpush1.msra.mxu0 0.0
        %1833 = vmatprep.subr.mxu0 0.0
        %1834 = vmatpush1.msra.mxu0 0.0
        %1835 = vmatprep.subr.mxu0 0.0
        %1836 = vmatpush1.msra.mxu0 0.0
        %1837 = vmatprep.subr.mxu0 0.0
        %1838 = vmatpush1.msra.mxu0 0.0
        %1839 = vmatprep.subr.mxu0 0.0
        %1840 = vmatpush1.msra.mxu0 0.0
        %1841 = vmatprep.subr.mxu0 0.0
        %1842 = vmatpush1.msra.mxu0 0.0
        %1843 = vmatprep.subr.mxu0 0.0
        %1844 = vmatpush1.msra.mxu0 0.0
        %1845 = vmatprep.subr.mxu0 0.0
        %1846 = vmatpush1.msra.mxu0 0.0
        %1847 = vmatprep.subr.mxu0 0.0
        %1848 = vmatpush1.msra.mxu0 0.0
        %1849 = vmatprep.subr.mxu0 0.0
        %1850 = vmatpush1.msra.mxu0 0.0
        %1851 = vmatprep.subr.mxu0 0.0
        %1852 = vmatpush1.msra.mxu0 0.0
        %1853 = vmatprep.subr.mxu0 0.0
        %1854 = vmatpush1.msra.mxu0 0.0
        %1855 = vmatprep.subr.mxu0 0.0
        %1856 = vmatpush1.msra.mxu0 0.0
        %1857 = vmatprep.subr.mxu0 0.0
        %1858 = vmatpush1.msra.mxu0 0.0
        %1859 = vmatprep.subr.mxu0 0.0
        %1860 = vmatpush1.msra.mxu0 0.0
        %1861 = vmatprep.subr.mxu0 0.0
        %1862 = vmatpush1.msra.mxu0 0.0
        %1863 = vmatprep.subr.mxu0 0.0
        %1864 = vmatpush1.msra.mxu0 0.0
        %1865 = vmatprep.subr.mxu0 0.0
        %1866 = vmatpush1.msra.mxu0 0.0
        %1867 = vmatprep.subr.mxu0 0.0
        %1868 = vmatpush1.msra.mxu0 0.0
        %1869 = vmatprep.subr.mxu0 0.0
        %1870 = vmatpush1.msra.mxu0 0.0
        %1871 = vmatprep.subr.mxu0 0.0
        %1872 = vmatpush1.msra.mxu0 0.0
        %1873 = vmatprep.subr.mxu0 0.0
        %1874 = vmatpush1.msra.mxu0 0.0
        %1875 = vmatprep.subr.mxu0 0.0
        %1876 = vmatpush1.msra.mxu0 0.0
        %1877 = vmatprep.subr.mxu0 0.0
        %1878 = vmatpush1.msra.mxu0 0.0
        %1879 = vmatprep.subr.mxu0 0.0
        %1880 = vmatpush1.msra.mxu0 0.0
        %1881 = vmatprep.subr.mxu0 0.0
        %1882 = vmatpush1.msra.mxu0 0.0
        %1883 = vmatprep.subr.mxu0 0.0
        %1884 = vmatpush1.msra.mxu0 0.0
        %1885 = vmatprep.subr.mxu0 0.0
        %1886 = vmatpush1.msra.mxu0 0.0
        %1887 = vmatprep.subr.mxu0 0.0
        %1888 = vmatpush1.msra.mxu0 0.0
        %1889 = vmatprep.subr.mxu0 0.0
        %1890 = vmatpush1.msra.mxu0 0.0
        %1891 = vmatprep.mubr.f32.mxu0 0.0
        %1892 = vmatmul.mubr.f32.gmra.mrb[0].mxu0 %v1825
        %v1893 = vpop.f32.mrb[0].mxu0
        %v1894 = vadd.f32 0.0, %v1893
        %v1895 = vpop.f32.mrb[0].mxu0
        %1896 = vdwg.mxu0
        %v1897 = vcombine.low %v1675, %v1821
        %v1898 = vcombine.high %v1675, %v1821
        %v1900 = vunpack.c.l.s4 1983009808
        %v1901 = vunpack.c.0.s8 %v1900
        %v1902 = vlaneseq
        %v1903 = vshrl.u32 %v1902, 7
        %v1904 = vsub.s32 %v1901, %v1903
        %v1905 = vrot.slane %v1897, %v1904
        %v1907 = vunpack.c.l.s4 1983009808
        %v1908 = vunpack.c.0.s8 %v1907
        %v1909 = vlaneseq
        %v1910 = vshrl.u32 %v1909, 7
        %v1911 = vsub.s32 %v1908, %v1910
        %v1912 = vrot.slane %v1898, %v1911
        %v1913 = vcombine.low %v1748, %v1894
        %v1914 = vcombine.high %v1748, %v1894
        %v1916 = vunpack.c.l.s4 1983009808
        %v1917 = vunpack.c.0.s8 %v1916
        %v1918 = vlaneseq
        %v1919 = vshrl.u32 %v1918, 7
        %v1920 = vsub.s32 %v1917, %v1919
        %v1921 = vrot.slane %v1913, %v1920
        %v1923 = vunpack.c.l.s4 1983009808
        %v1924 = vunpack.c.0.s8 %v1923
        %v1925 = vlaneseq
        %v1926 = vshrl.u32 %v1925, 7
        %v1927 = vsub.s32 %v1924, %v1926
        %v1928 = vrot.slane %v1914, %v1927
        %v1929 = vcombine.low %v1905, %v1921
        %v1930 = vcombine.high %v1905, %v1921
        %v1932 = vunpack.c.l.s4 1934713408
        %v1933 = vunpack.c.0.s8 %v1932
        %v1934 = vlaneseq
        %v1935 = vshrl.u32 %v1934, 7
        %v1936 = vsub.s32 %v1933, %v1935
        %v1937 = vrot.slane %v1929, %v1936
        %v1939 = vunpack.c.l.s4 1934713408
        %v1940 = vunpack.c.0.s8 %v1939
        %v1941 = vlaneseq
        %v1942 = vshrl.u32 %v1941, 7
        %v1943 = vsub.s32 %v1940, %v1942
        %v1944 = vrot.slane %v1930, %v1943
        %v1945 = vcombine.low %v1912, %v1928
        %v1946 = vcombine.high %v1912, %v1928
        %v1948 = vunpack.c.l.s4 1934713408
        %v1949 = vunpack.c.0.s8 %v1948
        %v1950 = vlaneseq
        %v1951 = vshrl.u32 %v1950, 7
        %v1952 = vsub.s32 %v1949, %v1951
        %v1953 = vrot.slane %v1945, %v1952
        %v1955 = vunpack.c.l.s4 1934713408
        %v1956 = vunpack.c.0.s8 %v1955
        %v1957 = vlaneseq
        %v1958 = vshrl.u32 %v1957, 7
        %v1959 = vsub.s32 %v1956, %v1958
        %v1960 = vrot.slane %v1946, %v1959
        %v1961 = vcombine.high %v1937, 0.0
        %v1962 = vcombine.high %v1944, 0.0
        %v1963 = vcombine.high %v1953, 0.0
        %v1964 = vcombine.high %v1960, 0.0
        %v1965 = vcombine.low %v1937, %v1944
        %v1967 = vunpack.c.l.s4 1983009808
        %v1968 = vunpack.c.0.s8 %v1967
        %v1969 = vlaneseq
        %v1970 = vshrl.u32 %v1969, 7
        %v1971 = vsub.s32 %v1968, %v1970
        %v1972 = vrot.slane %v1965, %v1971
        %v1973 = vcombine.low %v1961, %v1962
        %v1975 = vunpack.c.l.s4 1983009808
        %v1976 = vunpack.c.0.s8 %v1975
        %v1977 = vlaneseq
        %v1978 = vshrl.u32 %v1977, 7
        %v1979 = vsub.s32 %v1976, %v1978
        %v1980 = vrot.slane %v1973, %v1979
        %v1981 = vcombine.low %v1953, %v1960
        %v1983 = vunpack.c.l.s4 1983009808
        %v1984 = vunpack.c.0.s8 %v1983
        %v1985 = vlaneseq
        %v1986 = vshrl.u32 %v1985, 7
        %v1987 = vsub.s32 %v1984, %v1986
        %v1988 = vrot.slane %v1981, %v1987
        %v1989 = vcombine.low %v1963, %v1964
        %v1991 = vunpack.c.l.s4 1983009808
        %v1992 = vunpack.c.0.s8 %v1991
        %v1993 = vlaneseq
        %v1994 = vshrl.u32 %v1993, 7
        %v1995 = vsub.s32 %v1992, %v1994
        %v1996 = vrot.slane %v1989, %v1995
        %v1997 = vcombine.low %v1972, %v1980
        %v1998 = vcombine.high %v1972, %v1980
        %v2000 = vunpack.c.l.s4 1934713408
        %v2001 = vunpack.c.0.s8 %v2000
        %v2002 = vlaneseq
        %v2003 = vshrl.u32 %v2002, 7
        %v2004 = vsub.s32 %v2001, %v2003
        %v2005 = vrot.slane %v1997, %v2004
        %v2007 = vunpack.c.l.s4 1934713408
        %v2008 = vunpack.c.0.s8 %v2007
        %v2009 = vlaneseq
        %v2010 = vshrl.u32 %v2009, 7
        %v2011 = vsub.s32 %v2008, %v2010
        %v2012 = vrot.slane %v1998, %v2011
        %v2013 = vcombine.low %v1988, %v1996
        %v2014 = vcombine.high %v1988, %v1996
        %v2016 = vunpack.c.l.s4 1934713408
        %v2017 = vunpack.c.0.s8 %v2016
        %v2018 = vlaneseq
        %v2019 = vshrl.u32 %v2018, 7
        %v2020 = vsub.s32 %v2017, %v2019
        %v2021 = vrot.slane %v2013, %v2020
        %v2023 = vunpack.c.l.s4 1934713408
        %v2024 = vunpack.c.0.s8 %v2023
        %v2025 = vlaneseq
        %v2026 = vshrl.u32 %v2025, 7
        %v2027 = vsub.s32 %v2024, %v2026
        %v2028 = vrot.slane %v2014, %v2027
        %v2029 = vcombine.low %v2005, %v2021
        %v2030 = vcombine.high %v2005, %v2021
        %v2031 = vcombine.low %v2012, %v2028
        %v2032 = vcombine.high %v2012, %v2028
        %2034 = vrot.lane.b32.xlu0 %v2030, 8
        %v2035 = vpop.permute.xlu0 %2034
        %2038 = vrot.lane.b32.xlu0 %v2031, 16
        %v2039 = vpop.permute.xlu0 %2038
        %2042 = vrot.lane.b32.xlu0 %v2032, 24
        %v2043 = vpop.permute.xlu0 %2042
        %v2045 = vsel %vm1256, %v2029, %v2035
        %vm2046 = vcmask 130048
        %v2047 = vsel %vm2046, %v2045, %v2039
        %vm2048 = vcmask 195584
        %v2049 = vsel %vm2048, %v2047, %v2043
        %v2050 = vld [vmem:[#allocation2] sm:$0xff]
        %v2052 = vsel %vm589, %v2049, 0
        %2054 = vmatprep.subr.mxu0 0.0
        %2055 = vmatpush1.msra.mxu0 %v573
        %2056 = vmatprep.subr.mxu0 0.0
        %2057 = vmatpush1.msra.mxu0 %v574
        %2058 = vmatprep.subr.mxu0 0.0
        %2059 = vmatpush1.msra.mxu0 %v575
        %2060 = vmatprep.subr.mxu0 0.0
        %2061 = vmatpush1.msra.mxu0 %v576
        %2062 = vmatprep.subr.mxu0 0.0
        %2063 = vmatpush1.msra.mxu0 0.0
        %2064 = vmatprep.subr.mxu0 0.0
        %2065 = vmatpush1.msra.mxu0 0.0
        %2066 = vmatprep.subr.mxu0 0.0
        %2067 = vmatpush1.msra.mxu0 0.0
        %2068 = vmatprep.subr.mxu0 0.0
        %2069 = vmatpush1.msra.mxu0 0.0
        %2070 = vmatprep.subr.mxu0 0.0
        %2071 = vmatpush1.msra.mxu0 0.0
        %2072 = vmatprep.subr.mxu0 0.0
        %2073 = vmatpush1.msra.mxu0 0.0
        %2074 = vmatprep.subr.mxu0 0.0
        %2075 = vmatpush1.msra.mxu0 0.0
        %2076 = vmatprep.subr.mxu0 0.0
        %2077 = vmatpush1.msra.mxu0 0.0
        %2078 = vmatprep.subr.mxu0 0.0
        %2079 = vmatpush1.msra.mxu0 0.0
        %2080 = vmatprep.subr.mxu0 0.0
        %2081 = vmatpush1.msra.mxu0 0.0
        %2082 = vmatprep.subr.mxu0 0.0
        %2083 = vmatpush1.msra.mxu0 0.0
        %2084 = vmatprep.subr.mxu0 0.0
        %2085 = vmatpush1.msra.mxu0 0.0
        %2086 = vmatprep.subr.mxu0 0.0
        %2087 = vmatpush1.msra.mxu0 0.0
        %2088 = vmatprep.subr.mxu0 0.0
        %2089 = vmatpush1.msra.mxu0 0.0
        %2090 = vmatprep.subr.mxu0 0.0
        %2091 = vmatpush1.msra.mxu0 0.0
        %2092 = vmatprep.subr.mxu0 0.0
        %2093 = vmatpush1.msra.mxu0 0.0
        %2094 = vmatprep.subr.mxu0 0.0
        %2095 = vmatpush1.msra.mxu0 0.0
        %2096 = vmatprep.subr.mxu0 0.0
        %2097 = vmatpush1.msra.mxu0 0.0
        %2098 = vmatprep.subr.mxu0 0.0
        %2099 = vmatpush1.msra.mxu0 0.0
        %2100 = vmatprep.subr.mxu0 0.0
        %2101 = vmatpush1.msra.mxu0 0.0
        %2102 = vmatprep.subr.mxu0 0.0
        %2103 = vmatpush1.msra.mxu0 0.0
        %2104 = vmatprep.subr.mxu0 0.0
        %2105 = vmatpush1.msra.mxu0 0.0
        %2106 = vmatprep.subr.mxu0 0.0
        %2107 = vmatpush1.msra.mxu0 0.0
        %2108 = vmatprep.subr.mxu0 0.0
        %2109 = vmatpush1.msra.mxu0 0.0
        %2110 = vmatprep.subr.mxu0 0.0
        %2111 = vmatpush1.msra.mxu0 0.0
        %2112 = vmatprep.subr.mxu0 0.0
        %2113 = vmatpush1.msra.mxu0 0.0
        %2114 = vmatprep.subr.mxu0 0.0
        %2115 = vmatpush1.msra.mxu0 0.0
        %2116 = vmatprep.subr.mxu0 0.0
        %2117 = vmatpush1.msra.mxu0 0.0
        %2118 = vmatprep.mubr.f32.mxu0 0.0
        %2119 = vmatmul.mubr.f32.gmra.mrb[0].mxu0 %v2052
        %v2120 = vpop.f32.mrb[0].mxu0
        %v2121 = vadd.f32 0.0, %v2120
        %v2122 = vpop.f32.mrb[0].mxu0
        %2123 = vdwg.mxu0
        %v2124 = vadd.f32 %v2050, %v2121
        %2125 = vst.msk [vmem:[#allocation2] sm:$0xff] %vm589, %v2124
        // Predicated region
        $region97: #{tpu_custom_call.1} parent=67 // pred_check
          %p2126 = pneg %p548
        $region98: #{tpu_custom_call.1} parent=67 // pred_check_branch
          %2128 = sbr.rel (%p2126) target = $region100
        $region99: #{tpu_custom_call.1} parent=67 // pred_region
          %v2129 = vld [vmem:[#allocation2] sm:$0xff]
          %v2130 = vld [vmem:[%s9] sm:$0x1]
          %v2132 = vlaneseq
          %v2133 = vshrl.u32 %v2132, 7
          %v2134 = vsub.s32 0, %v2133
          %v2135 = vrot.slane %v2130, %v2134
          %v2137 = vadd.f32 %v2129, %v2135
          %v2138 = vadd.f32 %v554, %v2137
          %v2139 = vsel %vm589, %v2138, 0.0
          %2140 = vadd.xlane.f32.xlu0 %v2139
          %v2141 = vpop.xlane.xlu0 %2140
          %v2142 = vrcp.pop 32.0
          %v2143 = vmul.f32 %v2141, %v2142
          %v2144 = vsub.f32 %v2138, %v2143
          %v2145 = vmul.f32 %v2144, %v2144
          %v2146 = vsel %vm589, %v2145, 0.0
          %2147 = vadd.xlane.f32.xlu0 %v2146
          %v2148 = vpop.xlane.xlu0 %2147
          %v2149 = vmul.f32 %v2148, %v2142
          %v2150 = vadd.f32 %v2149, 1e-05
          %v2151 = vrsqrt.pop %v2150
          %v2152 = vmul.f32 %v2144, %v2151
          %v2153 = vld [vmem:[%s10] sm:$0x1]
          %v2155 = vlaneseq
          %v2156 = vshrl.u32 %v2155, 7
          %v2157 = vsub.s32 0, %v2156
          %v2158 = vrot.slane %v2153, %v2157
          %v2160 = vmul.f32 %v2152, %v2158
          %v2161 = vld [vmem:[%s11] sm:$0x1]
          %v2163 = vlaneseq
          %v2164 = vshrl.u32 %v2163, 7
          %v2165 = vsub.s32 0, %v2164
          %v2166 = vrot.slane %v2161, %v2165
          %v2168 = vadd.f32 %v2160, %v2166
          %2169 = vst.msk [vmem:[%s547] sm:$0xff] %vm589, %v2168
        $region100: #{tpu_custom_call.1} parent=67 // pred_fallthru
          _
        %s2170 = sand.u32 %s327, 1
        %s2171 = scalar_lea.sflag [#allocation5], %s2170
        %s2172 = sand.u32 %s327, 1
        %s2173 = smul.addr %s2172, 8
        %s2174 = scalar_lea.vmem [#allocation14], %s2173
        // Predicated region
        $region101: #{tpu_custom_call.1} parent=67 // pred_check
          %p2175 = pneg %p337
        $region102: #{tpu_custom_call.1} parent=67 // pred_check_branch
          %2177 = sbr.rel (%p2175) target = $region104
        $region103: #{tpu_custom_call.1} parent=67 // pred_region
          %s2179 = ssub.s32 128, 128
          %2180 = vsyncadd %s2171, %s2179
          %s2181 = sadd.s32 %s40, %s39
          %s2182 = smul.addr %s2181, 128
          %s2183 = scalar_lea.hbm %s12, %s2182
          %s2185 = sshll.u32 %s2174, 4
          %s2186 = int_to_ptr.vmem [resolvable:$true] %s2185
          %2188 = dma.vmem_to_hbm [thread:$0]  %s2186, 128, %s2183, %s2171
        $region104: #{tpu_custom_call.1} parent=67 // pred_fallthru
          _
      $region68: #{tpu_custom_call.1} parent=5 // pred_fallthru
        _
      %p2189 = scmp.le.s32.totalorder 2, %s29
      // Predicated region
      $region105: #{tpu_custom_call.1} parent=5 // pred_check
        %p2190 = pneg %p2189
      $region106: #{tpu_custom_call.1} parent=5 // pred_check_branch
        %2192 = sbr.rel (%p2190) target = $region108
      $region107: #{tpu_custom_call.1} parent=5 // pred_region
        %s2193 = ssub.s32 %s29, 2
        // Predicated region
        $region109: #{tpu_custom_call.1} parent=107 // pred_check
          %p2194 = pneg %p343
        $region110: #{tpu_custom_call.1} parent=107 // pred_check_branch
          %2196 = sbr.rel (%p2194) target = $region112
        $region111: #{tpu_custom_call.1} parent=107 // pred_region
          %s2197 = sand.u32 %s328, 1
          %s2198 = scalar_lea.sflag [#allocation5], %s2197
          %s2199 = sand.u32 %s328, 1
          %s2200 = smul.addr %s2199, 8
          %s2201 = scalar_lea.vmem [#allocation14], %s2200
          %2202 = dma.done %s2198, 128
        $region112: #{tpu_custom_call.1} parent=107 // pred_fallthru
          _
      $region108: #{tpu_custom_call.1} parent=5 // pred_fallthru
        _
    $region6: #{tpu_custom_call.1} parent=1 // loop_footer
      %s33 = sadd.s32 1, %s29
    $region7: #{tpu_custom_call.1} parent=1 // loop_footer_branch
      %28 = sbr.rel target = $region3
    $region8: #{tpu_custom_call.1} parent=1 // loop_exit
      _
    %2203 = vsyncpa [#allocation4], 1
    %s2204 = scalar_lea.sflag [#allocation4], 1
    %2205 = vsyncpa %s2204, 1
    %2206 = vsyncpa [#allocation7], 1
    %s2207 = scalar_lea.sflag [#allocation7], 1
    %2208 = vsyncpa %s2207, 1
    %2209 = vsyncpa [#allocation10], 1
    %2210 = vsyncpa [#allocation13], 1
    %2211 = vsyncpa [#allocation5], 1
    %s2212 = scalar_lea.sflag [#allocation5], 1
    %2213 = vsyncpa %s2212, 1

</llo_original>
